<compile_context>
chip_gen: v6e
topology: v6e:2x2x1
jax: 0.10.0
libtpu: 0.0.40
codegen_flags: <defaults>
</compile_context>

<pallas_src>
import jax
import jax.numpy as jnp
from jax.experimental import pallas as pl
from jax.experimental.pallas import tpu as pltpu

HIDDEN = 768
LN_EPS = 1e-12


def _self_output_kernel(x_ref, r_ref, w_ref, b_ref, g_ref, bb_ref, o_ref):
    # y = x @ W + b   (x, W in bf16; fp32 accumulation on the MXU)
    y = jnp.dot(x_ref[...], w_ref[...], preferred_element_type=jnp.float32)
    # fused epilogue: bias + residual + TF-style LayerNorm (eps inside the sqrt,
    # biased variance) -- all in fp32.
    y = y + b_ref[...] + r_ref[...]
    u = jnp.mean(y, axis=-1, keepdims=True)
    yc = y - u
    s = jnp.mean(yc * yc, axis=-1, keepdims=True)
    o_ref[...] = g_ref[...] * (yc * jax.lax.rsqrt(s + LN_EPS)) + bb_ref[...]


def _round_up(x, m):
    return (x + m - 1) // m * m


def transformer_self_output(hidden_states, input_tensor, params, *, tm=256):
    """LayerNorm(hidden_states @ W + b + input_tensor), hidden_states/input_tensor: [B,S,768]."""
    B, S, H = hidden_states.shape
    assert H == HIDDEN
    M = B * S

    # Row-tile size: multiple of 8 sublanes, capped by the (padded) row count.
    tm = min(tm, _round_up(M, 8))
    mp = _round_up(M, tm)

    x = hidden_states.reshape(M, H).astype(jnp.bfloat16)   # matmul LHS in bf16
    r = input_tensor.reshape(M, H).astype(jnp.float32)     # residual stays fp32
    if mp != M:
        x = jnp.pad(x, ((0, mp - M), (0, 0)))
        r = jnp.pad(r, ((0, mp - M), (0, 0)))

    w = params["w"].astype(jnp.bfloat16)                   # (H_in, H_out) == weight.T
    b = params["b"].reshape(1, H).astype(jnp.float32)
    g = params["ln_g"].reshape(1, H).astype(jnp.float32)
    bb = params["ln_b"].reshape(1, H).astype(jnp.float32)

    row_map = lambda i: (i, 0)
    fixed_map = lambda i: (0, 0)

    out = pl.pallas_call(
        _self_output_kernel,
        out_shape=jax.ShapeDtypeStruct((mp, H), jnp.float32),
        grid=(mp // tm,),
        in_specs=[
            pl.BlockSpec((tm, H), row_map),    # activation rows (pipelined)
            pl.BlockSpec((tm, H), row_map),    # residual rows (pipelined)
            pl.BlockSpec((H, H), fixed_map),   # weight: index-invariant, VMEM-resident
            pl.BlockSpec((1, H), fixed_map),   # bias
            pl.BlockSpec((1, H), fixed_map),   # LN gamma
            pl.BlockSpec((1, H), fixed_map),   # LN beta
        ],
        out_specs=pl.BlockSpec((tm, H), row_map),
        compiler_params=pltpu.CompilerParams(dimension_semantics=("parallel",)),
    )(x, r, w, b, g, bb)

    return out[:M].reshape(B, S, H)


def _reference(hidden_states, input_tensor, params):
    y = hidden_states.reshape(-1, HIDDEN) @ params["w"] + params["b"]
    y = y + input_tensor.reshape(-1, HIDDEN)
    u = y.mean(-1, keepdims=True)
    s = ((y - u) ** 2).mean(-1, keepdims=True)
    out = params["ln_g"] * ((y - u) / jnp.sqrt(s + LN_EPS)) + params["ln_b"]
    return out.reshape(hidden_states.shape)


if __name__ == "__main__":
    key = jax.random.PRNGKey(0)
    k1, k2, k3, k4 = jax.random.split(key, 4)

    B, S = 2, 8
    hidden_states = jax.random.normal(k1, (B, S, HIDDEN), dtype=jnp.float32)
    input_tensor = jax.random.normal(k2, (B, S, HIDDEN), dtype=jnp.float32)
    params = {
        "w": 0.02 * jax.random.normal(k3, (HIDDEN, HIDDEN), dtype=jnp.float32),
        "b": 0.02 * jax.random.normal(k4, (HIDDEN,), dtype=jnp.float32),
        "ln_g": jnp.ones((HIDDEN,), jnp.float32),
        "ln_b": jnp.zeros((HIDDEN,), jnp.float32),
    }

    out = jax.jit(transformer_self_output)(hidden_states, input_tensor, params)
    jax.block_until_ready(out)

    assert out.shape == (B, S, HIDDEN)
    assert out.dtype == jnp.float32

    ref = _reference(hidden_states, input_tensor, params)
    max_err = float(jnp.max(jnp.abs(out - ref)))
    assert jnp.allclose(out, ref, atol=5e-2, rtol=5e-2), f"max abs err {max_err}"

    print("KERNEL_OK")
</pallas_src>

<mosaic_0001>
module attributes {stable_mosaic.version = 11 : i64} {
  func.func @_self_output_kernel(%arg0: i32, %arg1: memref<16x768xbf16, #tpu.memory_space<vmem>>, %arg2: memref<16x768xf32, #tpu.memory_space<vmem>>, %arg3: memref<768x768xbf16, #tpu.memory_space<vmem>>, %arg4: memref<1x768xf32, #tpu.memory_space<vmem>>, %arg5: memref<1x768xf32, #tpu.memory_space<vmem>>, %arg6: memref<1x768xf32, #tpu.memory_space<vmem>>, %arg7: memref<16x768xf32, #tpu.memory_space<vmem>>) attributes {dimension_semantics = [#tpu.dimension_semantics<parallel>], iteration_bounds = array<i64: 1>, scalar_prefetch = 0 : i64, scratch_operands = 0 : i64, tpu.core_type = #tpu.core_type<tc>, window_params = [{transform_indices = @transform_0, window_bounds = array<i64: 16, 768>}, {transform_indices = @transform_1, window_bounds = array<i64: 16, 768>}, {pipeline_mode = #tpu.pipeline_mode<synchronous>, transform_indices = @transform_2, window_bounds = array<i64: 768, 768>}, {pipeline_mode = #tpu.pipeline_mode<synchronous>, transform_indices = @transform_3, window_bounds = array<i64: 1, 768>}, {pipeline_mode = #tpu.pipeline_mode<synchronous>, transform_indices = @transform_4, window_bounds = array<i64: 1, 768>}, {pipeline_mode = #tpu.pipeline_mode<synchronous>, transform_indices = @transform_5, window_bounds = array<i64: 1, 768>}, {transform_indices = @transform_6, window_bounds = array<i64: 16, 768>}]} {
    %c0 = arith.constant 0 : index
    %c0_0 = arith.constant 0 : index
    %0 = vector.load %arg1[%c0, %c0_0] : memref<16x768xbf16, #tpu.memory_space<vmem>>, vector<16x768xbf16>
    %c0_1 = arith.constant 0 : index
    %c0_2 = arith.constant 0 : index
    %1 = vector.load %arg3[%c0_1, %c0_2] : memref<768x768xbf16, #tpu.memory_space<vmem>>, vector<768x768xbf16>
    %cst = arith.constant dense<0.000000e+00> : vector<16x768xf32>
    %2 = tpu.matmul %0, %1, %cst {dimension_numbers = #tpu.dot_dimension_numbers<[1], [0], [0], [1], [0, 0, 1, 1], [], []>} : vector<16x768xbf16>, vector<768x768xbf16>, vector<16x768xf32> -> vector<16x768xf32>
    %c0_3 = arith.constant 0 : index
    %c0_4 = arith.constant 0 : index
    %3 = vector.load %arg4[%c0_3, %c0_4] : memref<1x768xf32, #tpu.memory_space<vmem>>, vector<1x768xf32>
    %4 = vector.broadcast %3 : vector<1x768xf32> to vector<16x768xf32>
    %5 = arith.addf %2, %4 : vector<16x768xf32>
    %c0_5 = arith.constant 0 : index
    %c0_6 = arith.constant 0 : index
    %6 = vector.load %arg2[%c0_5, %c0_6] : memref<16x768xf32, #tpu.memory_space<vmem>>, vector<16x768xf32>
    %7 = arith.addf %5, %6 : vector<16x768xf32>
    %cst_7 = arith.constant dense<0.000000e+00> : vector<16xf32>
    %8 = vector.multi_reduction <add>, %7, %cst_7 [1] : vector<16x768xf32> to vector<16xf32>
    %9 = vector.shape_cast %8 : vector<16xf32> to vector<16x1xf32>
    %cst_8 = arith.constant 7.680000e+02 : f32
    %10 = vector.broadcast %cst_8 : f32 to vector<16x1xf32>
    %11 = arith.divf %9, %10 : vector<16x1xf32>
    %12 = vector.broadcast %11 : vector<16x1xf32> to vector<16x768xf32>
    %13 = arith.subf %7, %12 : vector<16x768xf32>
    %14 = arith.mulf %13, %13 : vector<16x768xf32>
    %cst_9 = arith.constant dense<0.000000e+00> : vector<16xf32>
    %15 = vector.multi_reduction <add>, %14, %cst_9 [1] : vector<16x768xf32> to vector<16xf32>
    %16 = vector.shape_cast %15 : vector<16xf32> to vector<16x1xf32>
    %cst_10 = arith.constant 7.680000e+02 : f32
    %17 = vector.broadcast %cst_10 : f32 to vector<16x1xf32>
    %18 = arith.divf %16, %17 : vector<16x1xf32>
    %c0_11 = arith.constant 0 : index
    %c0_12 = arith.constant 0 : index
    %19 = vector.load %arg5[%c0_11, %c0_12] : memref<1x768xf32, #tpu.memory_space<vmem>>, vector<1x768xf32>
    %cst_13 = arith.constant 9.99999996E-13 : f32
    %20 = vector.broadcast %cst_13 : f32 to vector<16x1xf32>
    %21 = arith.addf %18, %20 : vector<16x1xf32>
    %22 = math.rsqrt %21 : vector<16x1xf32>
    %23 = vector.broadcast %22 : vector<16x1xf32> to vector<16x768xf32>
    %24 = arith.mulf %13, %23 : vector<16x768xf32>
    %25 = vector.broadcast %19 : vector<1x768xf32> to vector<16x768xf32>
    %26 = arith.mulf %25, %24 : vector<16x768xf32>
    %c0_14 = arith.constant 0 : index
    %c0_15 = arith.constant 0 : index
    %27 = vector.load %arg6[%c0_14, %c0_15] : memref<1x768xf32, #tpu.memory_space<vmem>>, vector<1x768xf32>
    %28 = vector.broadcast %27 : vector<1x768xf32> to vector<16x768xf32>
    %29 = arith.addf %26, %28 : vector<16x768xf32>
    %c0_16 = arith.constant 0 : index
    %c0_17 = arith.constant 0 : index
    %30 = vector.load %arg7[%c0_16, %c0_17] : memref<16x768xf32, #tpu.memory_space<vmem>>, vector<16x768xf32>
    tpu.vector_store %arg7[%c0_16, %c0_17], %29 {strides = array<i32>} : memref<16x768xf32, #tpu.memory_space<vmem>>, vector<16x768xf32>,
    return
  }
  func.func @transform_0(%arg0: i32) -> (i32, i32) {
    %c0_i32 = arith.constant 0 : i32
    %c0_i32_0 = arith.constant 0 : i32
    return %arg0, %c0_i32 : i32, i32
  }
  func.func @transform_1(%arg0: i32) -> (i32, i32) {
    %c0_i32 = arith.constant 0 : i32
    %c0_i32_0 = arith.constant 0 : i32
    return %arg0, %c0_i32 : i32, i32
  }
  func.func @transform_2(%arg0: i32) -> (i32, i32) {
    %c0_i32 = arith.constant 0 : i32
    %c0_i32_0 = arith.constant 0 : i32
    %c0_i32_1 = arith.constant 0 : i32
    return %c0_i32, %c0_i32_0 : i32, i32
  }
  func.func @transform_3(%arg0: i32) -> (i32, i32) {
    %c0_i32 = arith.constant 0 : i32
    %c0_i32_0 = arith.constant 0 : i32
    %c0_i32_1 = arith.constant 0 : i32
    return %c0_i32, %c0_i32_0 : i32, i32
  }
  func.func @transform_4(%arg0: i32) -> (i32, i32) {
    %c0_i32 = arith.constant 0 : i32
    %c0_i32_0 = arith.constant 0 : i32
    %c0_i32_1 = arith.constant 0 : i32
    return %c0_i32, %c0_i32_0 : i32, i32
  }
  func.func @transform_5(%arg0: i32) -> (i32, i32) {
    %c0_i32 = arith.constant 0 : i32
    %c0_i32_0 = arith.constant 0 : i32
    %c0_i32_1 = arith.constant 0 : i32
    return %c0_i32, %c0_i32_0 : i32, i32
  }
  func.func @transform_6(%arg0: i32) -> (i32, i32) {
    %c0_i32 = arith.constant 0 : i32
    %c0_i32_0 = arith.constant 0 : i32
    return %arg0, %c0_i32 : i32, i32
  }
}

</mosaic_0001>

<llo_original>
// kernel: transformer_self_output.1
$region0: #{transformer_self_output.1}
  #allocation0 [shape = 'u32[]', space=smem, size = 0x4, offset = 0x4, fixed_abs, tag = 'smem constant byte address 0x4 - core index']
  #allocation1 [shape = 'u32[144,128]{1,0:T(1,128)}', space=vmem, size = 0x12000, scoped, tag = 'internal scratch']
  %s0 = inlined_call_operand.vmem [shape: bf16[16,768], index: 0, kind: input, shape index: {}]
  %s1 = inlined_call_operand.vmem [shape: f32[16,768], index: 1, kind: input, shape index: {}]
  %s2 = inlined_call_operand.vmem [shape: bf16[768,768], index: 2, kind: input, shape index: {}]
  %s3 = inlined_call_operand.vmem [shape: f32[1,768], index: 3, kind: input, shape index: {}]
  %s4 = inlined_call_operand.vmem [shape: f32[1,768], index: 4, kind: input, shape index: {}]
  %s5 = inlined_call_operand.vmem [shape: f32[1,768], index: 5, kind: input, shape index: {}]
  %s6 = inlined_call_operand.hbm [shape: f32[16,768], index: 6, kind: output, shape index: {}]
  %s7 = sld [smem:[#allocation0]]
  $region34: #{transformer_self_output.1} parent=0
    _
  %s9 = ssub.s32 1, %s7
  %s10 = scalar_select 0, %s9, %s7
  $region1: #{transformer_self_output.1} parent=0
    #allocation2 [shape = 'u8[49152]{0}', space=vmem, size = 0xc000, scoped, tag = 'output window, operand 0, single buffered']
    #allocation3 [shape = 's32[1]{0}', space=sflag, size = 0x4, scoped, tag = 'scoped memory for transformer_self_output.1']
    %11 = vsyncpa [#allocation3], 0
    // Predicated region
    $region2: #{transformer_self_output.1} parent=1 // pred_check
      _
    $region3: #{transformer_self_output.1} parent=1 // pred_check_branch
      %13 = sbr.rel (0) target = $region5
    $region4: #{transformer_self_output.1} parent=1 // pred_region
      _
    $region5: #{transformer_self_output.1} parent=1 // pred_fallthru
      _
    // Predicated region
    $region6: #{transformer_self_output.1} parent=1 // pred_check
      _
    $region7: #{transformer_self_output.1} parent=1 // pred_check_branch
      %15 = sbr.rel (0) target = $region9
    $region8: #{transformer_self_output.1} parent=1 // pred_region
      _
    $region9: #{transformer_self_output.1} parent=1 // pred_fallthru
      _
    // Predicated region
    $region10: #{transformer_self_output.1} parent=1 // pred_check
      _
    $region11: #{transformer_self_output.1} parent=1 // pred_check_branch
      %17 = sbr.rel (0) target = $region13
    $region12: #{transformer_self_output.1} parent=1 // pred_region
      _
    $region13: #{transformer_self_output.1} parent=1 // pred_fallthru
      _
    // Predicated region
    $region14: #{transformer_self_output.1} parent=1 // pred_check
      _
    $region15: #{transformer_self_output.1} parent=1 // pred_check_branch
      %19 = sbr.rel (0) target = $region17
    $region16: #{transformer_self_output.1} parent=1 // pred_region
      _
    $region17: #{transformer_self_output.1} parent=1 // pred_fallthru
      _
    // Predicated region
    $region18: #{transformer_self_output.1} parent=1 // pred_check
      _
    $region19: #{transformer_self_output.1} parent=1 // pred_check_branch
      %21 = sbr.rel (0) target = $region21
    $region20: #{transformer_self_output.1} parent=1 // pred_region
      _
    $region21: #{transformer_self_output.1} parent=1 // pred_fallthru
      _
    // Predicated region
    $region22: #{transformer_self_output.1} parent=1 // pred_check
      _
    $region23: #{transformer_self_output.1} parent=1 // pred_check_branch
      %23 = sbr.rel (0) target = $region25
    $region24: #{transformer_self_output.1} parent=1 // pred_region
      _
    $region25: #{transformer_self_output.1} parent=1 // pred_fallthru
      _
    %v24 = vld [vmem:[%s0] sm:$0xff]
    %v25 = vld [vmem:[%s0 + $0x8] sm:$0xff]
    %v26 = vld [vmem:[%s0 + $0x10] sm:$0xff]
    %v27 = vld [vmem:[%s0 + $0x18] sm:$0xff]
    %v28 = vld [vmem:[%s0 + $0x20] sm:$0xff]
    %v29 = vld [vmem:[%s0 + $0x28] sm:$0xff]
    %v30 = vld [vmem:[%s2] sm:$0xff]
    %v31 = vld [vmem:[%s2 + $0x8] sm:$0xff]
    %v32 = vld [vmem:[%s2 + $0x10] sm:$0xff]
    %v33 = vld [vmem:[%s2 + $0x18] sm:$0xff]
    %v34 = vld [vmem:[%s2 + $0x20] sm:$0xff]
    %v35 = vld [vmem:[%s2 + $0x28] sm:$0xff]
    %v36 = vld [vmem:[%s2 + $0x30] sm:$0xff]
    %v37 = vld [vmem:[%s2 + $0x38] sm:$0xff]
    %v38 = vld [vmem:[%s2 + $0x40] sm:$0xff]
    %v39 = vld [vmem:[%s2 + $0x48] sm:$0xff]
    %v40 = vld [vmem:[%s2 + $0x50] sm:$0xff]
    %v41 = vld [vmem:[%s2 + $0x58] sm:$0xff]
    %v42 = vld [vmem:[%s2 + $0x60] sm:$0xff]
    %v43 = vld [vmem:[%s2 + $0x68] sm:$0xff]
    %v44 = vld [vmem:[%s2 + $0x70] sm:$0xff]
    %v45 = vld [vmem:[%s2 + $0x78] sm:$0xff]
    %v46 = vld [vmem:[%s2 + $0x80] sm:$0xff]
    %v47 = vld [vmem:[%s2 + $0x88] sm:$0xff]
    %v48 = vld [vmem:[%s2 + $0x90] sm:$0xff]
    %v49 = vld [vmem:[%s2 + $0x98] sm:$0xff]
    %v50 = vld [vmem:[%s2 + $0xa0] sm:$0xff]
    %v51 = vld [vmem:[%s2 + $0xa8] sm:$0xff]
    %v52 = vld [vmem:[%s2 + $0xb0] sm:$0xff]
    %v53 = vld [vmem:[%s2 + $0xb8] sm:$0xff]
    %v54 = vld [vmem:[%s2 + $0xc0] sm:$0xff]
    %v55 = vld [vmem:[%s2 + $0xc8] sm:$0xff]
    %v56 = vld [vmem:[%s2 + $0xd0] sm:$0xff]
    %v57 = vld [vmem:[%s2 + $0xd8] sm:$0xff]
    %v58 = vld [vmem:[%s2 + $0xe0] sm:$0xff]
    %v59 = vld [vmem:[%s2 + $0xe8] sm:$0xff]
    %v60 = vld [vmem:[%s2 + $0xf0] sm:$0xff]
    %v61 = vld [vmem:[%s2 + $0xf8] sm:$0xff]
    %v62 = vld [vmem:[%s2 + $0x100] sm:$0xff]
    %v63 = vld [vmem:[%s2 + $0x108] sm:$0xff]
    %v64 = vld [vmem:[%s2 + $0x110] sm:$0xff]
    %v65 = vld [vmem:[%s2 + $0x118] sm:$0xff]
    %v66 = vld [vmem:[%s2 + $0x120] sm:$0xff]
    %v67 = vld [vmem:[%s2 + $0x128] sm:$0xff]
    %v68 = vld [vmem:[%s2 + $0x130] sm:$0xff]
    %v69 = vld [vmem:[%s2 + $0x138] sm:$0xff]
    %v70 = vld [vmem:[%s2 + $0x140] sm:$0xff]
    %v71 = vld [vmem:[%s2 + $0x148] sm:$0xff]
    %v72 = vld [vmem:[%s2 + $0x150] sm:$0xff]
    %v73 = vld [vmem:[%s2 + $0x158] sm:$0xff]
    %v74 = vld [vmem:[%s2 + $0x160] sm:$0xff]
    %v75 = vld [vmem:[%s2 + $0x168] sm:$0xff]
    %v76 = vld [vmem:[%s2 + $0x170] sm:$0xff]
    %v77 = vld [vmem:[%s2 + $0x178] sm:$0xff]
    %v78 = vld [vmem:[%s2 + $0x180] sm:$0xff]
    %v79 = vld [vmem:[%s2 + $0x188] sm:$0xff]
    %v80 = vld [vmem:[%s2 + $0x190] sm:$0xff]
    %v81 = vld [vmem:[%s2 + $0x198] sm:$0xff]
    %v82 = vld [vmem:[%s2 + $0x1a0] sm:$0xff]
    %v83 = vld [vmem:[%s2 + $0x1a8] sm:$0xff]
    %v84 = vld [vmem:[%s2 + $0x1b0] sm:$0xff]
    %v85 = vld [vmem:[%s2 + $0x1b8] sm:$0xff]
    %v86 = vld [vmem:[%s2 + $0x1c0] sm:$0xff]
    %v87 = vld [vmem:[%s2 + $0x1c8] sm:$0xff]
    %v88 = vld [vmem:[%s2 + $0x1d0] sm:$0xff]
    %v89 = vld [vmem:[%s2 + $0x1d8] sm:$0xff]
    %v90 = vld [vmem:[%s2 + $0x1e0] sm:$0xff]
    %v91 = vld [vmem:[%s2 + $0x1e8] sm:$0xff]
    %v92 = vld [vmem:[%s2 + $0x1f0] sm:$0xff]
    %v93 = vld [vmem:[%s2 + $0x1f8] sm:$0xff]
    %v94 = vld [vmem:[%s2 + $0x200] sm:$0xff]
    %v95 = vld [vmem:[%s2 + $0x208] sm:$0xff]
    %v96 = vld [vmem:[%s2 + $0x210] sm:$0xff]
    %v97 = vld [vmem:[%s2 + $0x218] sm:$0xff]
    %v98 = vld [vmem:[%s2 + $0x220] sm:$0xff]
    %v99 = vld [vmem:[%s2 + $0x228] sm:$0xff]
    %v100 = vld [vmem:[%s2 + $0x230] sm:$0xff]
    %v101 = vld [vmem:[%s2 + $0x238] sm:$0xff]
    %v102 = vld [vmem:[%s2 + $0x240] sm:$0xff]
    %v103 = vld [vmem:[%s2 + $0x248] sm:$0xff]
    %v104 = vld [vmem:[%s2 + $0x250] sm:$0xff]
    %v105 = vld [vmem:[%s2 + $0x258] sm:$0xff]
    %v106 = vld [vmem:[%s2 + $0x260] sm:$0xff]
    %v107 = vld [vmem:[%s2 + $0x268] sm:$0xff]
    %v108 = vld [vmem:[%s2 + $0x270] sm:$0xff]
    %v109 = vld [vmem:[%s2 + $0x278] sm:$0xff]
    %v110 = vld [vmem:[%s2 + $0x280] sm:$0xff]
    %v111 = vld [vmem:[%s2 + $0x288] sm:$0xff]
    %v112 = vld [vmem:[%s2 + $0x290] sm:$0xff]
    %v113 = vld [vmem:[%s2 + $0x298] sm:$0xff]
    %v114 = vld [vmem:[%s2 + $0x2a0] sm:$0xff]
    %v115 = vld [vmem:[%s2 + $0x2a8] sm:$0xff]
    %v116 = vld [vmem:[%s2 + $0x2b0] sm:$0xff]
    %v117 = vld [vmem:[%s2 + $0x2b8] sm:$0xff]
    %v118 = vld [vmem:[%s2 + $0x2c0] sm:$0xff]
    %v119 = vld [vmem:[%s2 + $0x2c8] sm:$0xff]
    %v120 = vld [vmem:[%s2 + $0x2d0] sm:$0xff]
    %v121 = vld [vmem:[%s2 + $0x2d8] sm:$0xff]
    %v122 = vld [vmem:[%s2 + $0x2e0] sm:$0xff]
    %v123 = vld [vmem:[%s2 + $0x2e8] sm:$0xff]
    %v124 = vld [vmem:[%s2 + $0x2f0] sm:$0xff]
    %v125 = vld [vmem:[%s2 + $0x2f8] sm:$0xff]
    %v126 = vld [vmem:[%s2 + $0x300] sm:$0xff]
    %v127 = vld [vmem:[%s2 + $0x308] sm:$0xff]
    %v128 = vld [vmem:[%s2 + $0x310] sm:$0xff]
    %v129 = vld [vmem:[%s2 + $0x318] sm:$0xff]
    %v130 = vld [vmem:[%s2 + $0x320] sm:$0xff]
    %v131 = vld [vmem:[%s2 + $0x328] sm:$0xff]
    %v132 = vld [vmem:[%s2 + $0x330] sm:$0xff]
    %v133 = vld [vmem:[%s2 + $0x338] sm:$0xff]
    %v134 = vld [vmem:[%s2 + $0x340] sm:$0xff]
    %v135 = vld [vmem:[%s2 + $0x348] sm:$0xff]
    %v136 = vld [vmem:[%s2 + $0x350] sm:$0xff]
    %v137 = vld [vmem:[%s2 + $0x358] sm:$0xff]
    %v138 = vld [vmem:[%s2 + $0x360] sm:$0xff]
    %v139 = vld [vmem:[%s2 + $0x368] sm:$0xff]
    %v140 = vld [vmem:[%s2 + $0x370] sm:$0xff]
    %v141 = vld [vmem:[%s2 + $0x378] sm:$0xff]
    %v142 = vld [vmem:[%s2 + $0x380] sm:$0xff]
    %v143 = vld [vmem:[%s2 + $0x388] sm:$0xff]
    %v144 = vld [vmem:[%s2 + $0x390] sm:$0xff]
    %v145 = vld [vmem:[%s2 + $0x398] sm:$0xff]
    %v146 = vld [vmem:[%s2 + $0x3a0] sm:$0xff]
    %v147 = vld [vmem:[%s2 + $0x3a8] sm:$0xff]
    %v148 = vld [vmem:[%s2 + $0x3b0] sm:$0xff]
    %v149 = vld [vmem:[%s2 + $0x3b8] sm:$0xff]
    %v150 = vld [vmem:[%s2 + $0x3c0] sm:$0xff]
    %v151 = vld [vmem:[%s2 + $0x3c8] sm:$0xff]
    %v152 = vld [vmem:[%s2 + $0x3d0] sm:$0xff]
    %v153 = vld [vmem:[%s2 + $0x3d8] sm:$0xff]
    %v154 = vld [vmem:[%s2 + $0x3e0] sm:$0xff]
    %v155 = vld [vmem:[%s2 + $0x3e8] sm:$0xff]
    %v156 = vld [vmem:[%s2 + $0x3f0] sm:$0xff]
    %v157 = vld [vmem:[%s2 + $0x3f8] sm:$0xff]
    %v158 = vld [vmem:[%s2 + $0x400] sm:$0xff]
    %v159 = vld [vmem:[%s2 + $0x408] sm:$0xff]
    %v160 = vld [vmem:[%s2 + $0x410] sm:$0xff]
    %v161 = vld [vmem:[%s2 + $0x418] sm:$0xff]
    %v162 = vld [vmem:[%s2 + $0x420] sm:$0xff]
    %v163 = vld [vmem:[%s2 + $0x428] sm:$0xff]
    %v164 = vld [vmem:[%s2 + $0x430] sm:$0xff]
    %v165 = vld [vmem:[%s2 + $0x438] sm:$0xff]
    %v166 = vld [vmem:[%s2 + $0x440] sm:$0xff]
    %v167 = vld [vmem:[%s2 + $0x448] sm:$0xff]
    %v168 = vld [vmem:[%s2 + $0x450] sm:$0xff]
    %v169 = vld [vmem:[%s2 + $0x458] sm:$0xff]
    %v170 = vld [vmem:[%s2 + $0x460] sm:$0xff]
    %v171 = vld [vmem:[%s2 + $0x468] sm:$0xff]
    %v172 = vld [vmem:[%s2 + $0x470] sm:$0xff]
    %v173 = vld [vmem:[%s2 + $0x478] sm:$0xff]
    %v174 = vld [vmem:[%s2 + $0x480] sm:$0xff]
    %v175 = vld [vmem:[%s2 + $0x488] sm:$0xff]
    %v176 = vld [vmem:[%s2 + $0x490] sm:$0xff]
    %v177 = vld [vmem:[%s2 + $0x498] sm:$0xff]
    %v178 = vld [vmem:[%s2 + $0x4a0] sm:$0xff]
    %v179 = vld [vmem:[%s2 + $0x4a8] sm:$0xff]
    %v180 = vld [vmem:[%s2 + $0x4b0] sm:$0xff]
    %v181 = vld [vmem:[%s2 + $0x4b8] sm:$0xff]
    %v182 = vld [vmem:[%s2 + $0x4c0] sm:$0xff]
    %v183 = vld [vmem:[%s2 + $0x4c8] sm:$0xff]
    %v184 = vld [vmem:[%s2 + $0x4d0] sm:$0xff]
    %v185 = vld [vmem:[%s2 + $0x4d8] sm:$0xff]
    %v186 = vld [vmem:[%s2 + $0x4e0] sm:$0xff]
    %v187 = vld [vmem:[%s2 + $0x4e8] sm:$0xff]
    %v188 = vld [vmem:[%s2 + $0x4f0] sm:$0xff]
    %v189 = vld [vmem:[%s2 + $0x4f8] sm:$0xff]
    %v190 = vld [vmem:[%s2 + $0x500] sm:$0xff]
    %v191 = vld [vmem:[%s2 + $0x508] sm:$0xff]
    %v192 = vld [vmem:[%s2 + $0x510] sm:$0xff]
    %v193 = vld [vmem:[%s2 + $0x518] sm:$0xff]
    %v194 = vld [vmem:[%s2 + $0x520] sm:$0xff]
    %v195 = vld [vmem:[%s2 + $0x528] sm:$0xff]
    %v196 = vld [vmem:[%s2 + $0x530] sm:$0xff]
    %v197 = vld [vmem:[%s2 + $0x538] sm:$0xff]
    %v198 = vld [vmem:[%s2 + $0x540] sm:$0xff]
    %v199 = vld [vmem:[%s2 + $0x548] sm:$0xff]
    %v200 = vld [vmem:[%s2 + $0x550] sm:$0xff]
    %v201 = vld [vmem:[%s2 + $0x558] sm:$0xff]
    %v202 = vld [vmem:[%s2 + $0x560] sm:$0xff]
    %v203 = vld [vmem:[%s2 + $0x568] sm:$0xff]
    %v204 = vld [vmem:[%s2 + $0x570] sm:$0xff]
    %v205 = vld [vmem:[%s2 + $0x578] sm:$0xff]
    %v206 = vld [vmem:[%s2 + $0x580] sm:$0xff]
    %v207 = vld [vmem:[%s2 + $0x588] sm:$0xff]
    %v208 = vld [vmem:[%s2 + $0x590] sm:$0xff]
    %v209 = vld [vmem:[%s2 + $0x598] sm:$0xff]
    %v210 = vld [vmem:[%s2 + $0x5a0] sm:$0xff]
    %v211 = vld [vmem:[%s2 + $0x5a8] sm:$0xff]
    %v212 = vld [vmem:[%s2 + $0x5b0] sm:$0xff]
    %v213 = vld [vmem:[%s2 + $0x5b8] sm:$0xff]
    %v214 = vld [vmem:[%s2 + $0x5c0] sm:$0xff]
    %v215 = vld [vmem:[%s2 + $0x5c8] sm:$0xff]
    %v216 = vld [vmem:[%s2 + $0x5d0] sm:$0xff]
    %v217 = vld [vmem:[%s2 + $0x5d8] sm:$0xff]
    %v218 = vld [vmem:[%s2 + $0x5e0] sm:$0xff]
    %v219 = vld [vmem:[%s2 + $0x5e8] sm:$0xff]
    %v220 = vld [vmem:[%s2 + $0x5f0] sm:$0xff]
    %v221 = vld [vmem:[%s2 + $0x5f8] sm:$0xff]
    %v222 = vld [vmem:[%s2 + $0x600] sm:$0xff]
    %v223 = vld [vmem:[%s2 + $0x608] sm:$0xff]
    %v224 = vld [vmem:[%s2 + $0x610] sm:$0xff]
    %v225 = vld [vmem:[%s2 + $0x618] sm:$0xff]
    %v226 = vld [vmem:[%s2 + $0x620] sm:$0xff]
    %v227 = vld [vmem:[%s2 + $0x628] sm:$0xff]
    %v228 = vld [vmem:[%s2 + $0x630] sm:$0xff]
    %v229 = vld [vmem:[%s2 + $0x638] sm:$0xff]
    %v230 = vld [vmem:[%s2 + $0x640] sm:$0xff]
    %v231 = vld [vmem:[%s2 + $0x648] sm:$0xff]
    %v232 = vld [vmem:[%s2 + $0x650] sm:$0xff]
    %v233 = vld [vmem:[%s2 + $0x658] sm:$0xff]
    %v234 = vld [vmem:[%s2 + $0x660] sm:$0xff]
    %v235 = vld [vmem:[%s2 + $0x668] sm:$0xff]
    %v236 = vld [vmem:[%s2 + $0x670] sm:$0xff]
    %v237 = vld [vmem:[%s2 + $0x678] sm:$0xff]
    %v238 = vld [vmem:[%s2 + $0x680] sm:$0xff]
    %v239 = vld [vmem:[%s2 + $0x688] sm:$0xff]
    %v240 = vld [vmem:[%s2 + $0x690] sm:$0xff]
    %v241 = vld [vmem:[%s2 + $0x698] sm:$0xff]
    %v242 = vld [vmem:[%s2 + $0x6a0] sm:$0xff]
    %v243 = vld [vmem:[%s2 + $0x6a8] sm:$0xff]
    %v244 = vld [vmem:[%s2 + $0x6b0] sm:$0xff]
    %v245 = vld [vmem:[%s2 + $0x6b8] sm:$0xff]
    %v246 = vld [vmem:[%s2 + $0x6c0] sm:$0xff]
    %v247 = vld [vmem:[%s2 + $0x6c8] sm:$0xff]
    %v248 = vld [vmem:[%s2 + $0x6d0] sm:$0xff]
    %v249 = vld [vmem:[%s2 + $0x6d8] sm:$0xff]
    %v250 = vld [vmem:[%s2 + $0x6e0] sm:$0xff]
    %v251 = vld [vmem:[%s2 + $0x6e8] sm:$0xff]
    %v252 = vld [vmem:[%s2 + $0x6f0] sm:$0xff]
    %v253 = vld [vmem:[%s2 + $0x6f8] sm:$0xff]
    %v254 = vld [vmem:[%s2 + $0x700] sm:$0xff]
    %v255 = vld [vmem:[%s2 + $0x708] sm:$0xff]
    %v256 = vld [vmem:[%s2 + $0x710] sm:$0xff]
    %v257 = vld [vmem:[%s2 + $0x718] sm:$0xff]
    %v258 = vld [vmem:[%s2 + $0x720] sm:$0xff]
    %v259 = vld [vmem:[%s2 + $0x728] sm:$0xff]
    %v260 = vld [vmem:[%s2 + $0x730] sm:$0xff]
    %v261 = vld [vmem:[%s2 + $0x738] sm:$0xff]
    %v262 = vld [vmem:[%s2 + $0x740] sm:$0xff]
    %v263 = vld [vmem:[%s2 + $0x748] sm:$0xff]
    %v264 = vld [vmem:[%s2 + $0x750] sm:$0xff]
    %v265 = vld [vmem:[%s2 + $0x758] sm:$0xff]
    %v266 = vld [vmem:[%s2 + $0x760] sm:$0xff]
    %v267 = vld [vmem:[%s2 + $0x768] sm:$0xff]
    %v268 = vld [vmem:[%s2 + $0x770] sm:$0xff]
    %v269 = vld [vmem:[%s2 + $0x778] sm:$0xff]
    %v270 = vld [vmem:[%s2 + $0x780] sm:$0xff]
    %v271 = vld [vmem:[%s2 + $0x788] sm:$0xff]
    %v272 = vld [vmem:[%s2 + $0x790] sm:$0xff]
    %v273 = vld [vmem:[%s2 + $0x798] sm:$0xff]
    %v274 = vld [vmem:[%s2 + $0x7a0] sm:$0xff]
    %v275 = vld [vmem:[%s2 + $0x7a8] sm:$0xff]
    %v276 = vld [vmem:[%s2 + $0x7b0] sm:$0xff]
    %v277 = vld [vmem:[%s2 + $0x7b8] sm:$0xff]
    %v278 = vld [vmem:[%s2 + $0x7c0] sm:$0xff]
    %v279 = vld [vmem:[%s2 + $0x7c8] sm:$0xff]
    %v280 = vld [vmem:[%s2 + $0x7d0] sm:$0xff]
    %v281 = vld [vmem:[%s2 + $0x7d8] sm:$0xff]
    %v282 = vld [vmem:[%s2 + $0x7e0] sm:$0xff]
    %v283 = vld [vmem:[%s2 + $0x7e8] sm:$0xff]
    %v284 = vld [vmem:[%s2 + $0x7f0] sm:$0xff]
    %v285 = vld [vmem:[%s2 + $0x7f8] sm:$0xff]
    %v286 = vld [vmem:[%s2 + $0x800] sm:$0xff]
    %v287 = vld [vmem:[%s2 + $0x808] sm:$0xff]
    %v288 = vld [vmem:[%s2 + $0x810] sm:$0xff]
    %v289 = vld [vmem:[%s2 + $0x818] sm:$0xff]
    %v290 = vld [vmem:[%s2 + $0x820] sm:$0xff]
    %v291 = vld [vmem:[%s2 + $0x828] sm:$0xff]
    %v292 = vld [vmem:[%s2 + $0x830] sm:$0xff]
    %v293 = vld [vmem:[%s2 + $0x838] sm:$0xff]
    %v294 = vld [vmem:[%s2 + $0x840] sm:$0xff]
    %v295 = vld [vmem:[%s2 + $0x848] sm:$0xff]
    %v296 = vld [vmem:[%s2 + $0x850] sm:$0xff]
    %v297 = vld [vmem:[%s2 + $0x858] sm:$0xff]
    %v298 = vld [vmem:[%s2 + $0x860] sm:$0xff]
    %v299 = vld [vmem:[%s2 + $0x868] sm:$0xff]
    %v300 = vld [vmem:[%s2 + $0x870] sm:$0xff]
    %v301 = vld [vmem:[%s2 + $0x878] sm:$0xff]
    %v302 = vld [vmem:[%s2 + $0x880] sm:$0xff]
    %v303 = vld [vmem:[%s2 + $0x888] sm:$0xff]
    %v304 = vld [vmem:[%s2 + $0x890] sm:$0xff]
    %v305 = vld [vmem:[%s2 + $0x898] sm:$0xff]
    %v306 = vld [vmem:[%s2 + $0x8a0] sm:$0xff]
    %v307 = vld [vmem:[%s2 + $0x8a8] sm:$0xff]
    %v308 = vld [vmem:[%s2 + $0x8b0] sm:$0xff]
    %v309 = vld [vmem:[%s2 + $0x8b8] sm:$0xff]
    %v310 = vld [vmem:[%s2 + $0x8c0] sm:$0xff]
    %v311 = vld [vmem:[%s2 + $0x8c8] sm:$0xff]
    %v312 = vld [vmem:[%s2 + $0x8d0] sm:$0xff]
    %v313 = vld [vmem:[%s2 + $0x8d8] sm:$0xff]
    %v314 = vld [vmem:[%s2 + $0x8e0] sm:$0xff]
    %v315 = vld [vmem:[%s2 + $0x8e8] sm:$0xff]
    %v316 = vld [vmem:[%s2 + $0x8f0] sm:$0xff]
    %v317 = vld [vmem:[%s2 + $0x8f8] sm:$0xff]
    %v318 = vld [vmem:[%s3] sm:$0x3f]
    %v320 = vlaneseq
    %v321 = vshrl.u32 %v320, 7
    %v322 = vsub.s32 0, %v321
    %v323 = vrot.slane %v318, %v322
    %v324 = vlaneseq
    %v325 = vshrl.u32 %v324, 7
    %v326 = vsub.s32 1, %v325
    %v327 = vrot.slane %v318, %v326
    %v328 = vlaneseq
    %v329 = vshrl.u32 %v328, 7
    %v330 = vsub.s32 2, %v329
    %v331 = vrot.slane %v318, %v330
    %v332 = vlaneseq
    %v333 = vshrl.u32 %v332, 7
    %v334 = vsub.s32 3, %v333
    %v335 = vrot.slane %v318, %v334
    %v336 = vlaneseq
    %v337 = vshrl.u32 %v336, 7
    %v338 = vsub.s32 4, %v337
    %v339 = vrot.slane %v318, %v338
    %v340 = vlaneseq
    %v341 = vshrl.u32 %v340, 7
    %v342 = vsub.s32 5, %v341
    %v343 = vrot.slane %v318, %v342
    %v356 = vunpack.c.l.b16 %v24
    %v357 = vunpack.c.h.b16 %v24
    %v358 = vunpack.c.l.b16 %v25
    %v359 = vunpack.c.h.b16 %v25
    %v360 = vunpack.c.l.b16 %v26
    %v361 = vunpack.c.h.b16 %v26
    %v362 = vunpack.c.l.b16 %v27
    %v363 = vunpack.c.h.b16 %v27
    %v364 = vunpack.c.l.b16 %v28
    %v365 = vunpack.c.h.b16 %v28
    %v366 = vunpack.c.l.b16 %v29
    %v367 = vunpack.c.h.b16 %v29
    %v368 = vpack.c.b16 %v362, %v356
    %v369 = vpack.c.b16 %v363, %v357
    %v370 = vpack.c.b16 %v364, %v358
    %v371 = vpack.c.b16 %v365, %v359
    %v372 = vpack.c.b16 %v366, %v360
    %v373 = vpack.c.b16 %v367, %v361
    %v668 = vunpack.c.l.b16 %v30
    %v669 = vunpack.c.h.b16 %v30
    %v670 = vunpack.c.l.b16 %v31
    %v671 = vunpack.c.h.b16 %v31
    %v672 = vunpack.c.l.b16 %v32
    %v673 = vunpack.c.h.b16 %v32
    %v674 = vunpack.c.l.b16 %v33
    %v675 = vunpack.c.h.b16 %v33
    %v676 = vunpack.c.l.b16 %v34
    %v677 = vunpack.c.h.b16 %v34
    %v678 = vunpack.c.l.b16 %v35
    %v679 = vunpack.c.h.b16 %v35
    %v680 = vunpack.c.l.b16 %v36
    %v681 = vunpack.c.h.b16 %v36
    %v682 = vunpack.c.l.b16 %v37
    %v683 = vunpack.c.h.b16 %v37
    %v684 = vunpack.c.l.b16 %v38
    %v685 = vunpack.c.h.b16 %v38
    %v686 = vunpack.c.l.b16 %v39
    %v687 = vunpack.c.h.b16 %v39
    %v688 = vunpack.c.l.b16 %v40
    %v689 = vunpack.c.h.b16 %v40
    %v690 = vunpack.c.l.b16 %v41
    %v691 = vunpack.c.h.b16 %v41
    %v692 = vunpack.c.l.b16 %v42
    %v693 = vunpack.c.h.b16 %v42
    %v694 = vunpack.c.l.b16 %v43
    %v695 = vunpack.c.h.b16 %v43
    %v696 = vunpack.c.l.b16 %v44
    %v697 = vunpack.c.h.b16 %v44
    %v698 = vunpack.c.l.b16 %v45
    %v699 = vunpack.c.h.b16 %v45
    %v700 = vunpack.c.l.b16 %v46
    %v701 = vunpack.c.h.b16 %v46
    %v702 = vunpack.c.l.b16 %v47
    %v703 = vunpack.c.h.b16 %v47
    %v704 = vunpack.c.l.b16 %v48
    %v705 = vunpack.c.h.b16 %v48
    %v706 = vunpack.c.l.b16 %v49
    %v707 = vunpack.c.h.b16 %v49
    %v708 = vunpack.c.l.b16 %v50
    %v709 = vunpack.c.h.b16 %v50
    %v710 = vunpack.c.l.b16 %v51
    %v711 = vunpack.c.h.b16 %v51
    %v712 = vunpack.c.l.b16 %v52
    %v713 = vunpack.c.h.b16 %v52
    %v714 = vunpack.c.l.b16 %v53
    %v715 = vunpack.c.h.b16 %v53
    %v716 = vunpack.c.l.b16 %v54
    %v717 = vunpack.c.h.b16 %v54
    %v718 = vunpack.c.l.b16 %v55
    %v719 = vunpack.c.h.b16 %v55
    %v720 = vunpack.c.l.b16 %v56
    %v721 = vunpack.c.h.b16 %v56
    %v722 = vunpack.c.l.b16 %v57
    %v723 = vunpack.c.h.b16 %v57
    %v724 = vunpack.c.l.b16 %v58
    %v725 = vunpack.c.h.b16 %v58
    %v726 = vunpack.c.l.b16 %v59
    %v727 = vunpack.c.h.b16 %v59
    %v728 = vunpack.c.l.b16 %v60
    %v729 = vunpack.c.h.b16 %v60
    %v730 = vunpack.c.l.b16 %v61
    %v731 = vunpack.c.h.b16 %v61
    %v732 = vunpack.c.l.b16 %v62
    %v733 = vunpack.c.h.b16 %v62
    %v734 = vunpack.c.l.b16 %v63
    %v735 = vunpack.c.h.b16 %v63
    %v736 = vunpack.c.l.b16 %v64
    %v737 = vunpack.c.h.b16 %v64
    %v738 = vunpack.c.l.b16 %v65
    %v739 = vunpack.c.h.b16 %v65
    %v740 = vunpack.c.l.b16 %v66
    %v741 = vunpack.c.h.b16 %v66
    %v742 = vunpack.c.l.b16 %v67
    %v743 = vunpack.c.h.b16 %v67
    %v744 = vunpack.c.l.b16 %v68
    %v745 = vunpack.c.h.b16 %v68
    %v746 = vunpack.c.l.b16 %v69
    %v747 = vunpack.c.h.b16 %v69
    %v748 = vunpack.c.l.b16 %v70
    %v749 = vunpack.c.h.b16 %v70
    %v750 = vunpack.c.l.b16 %v71
    %v751 = vunpack.c.h.b16 %v71
    %v752 = vunpack.c.l.b16 %v72
    %v753 = vunpack.c.h.b16 %v72
    %v754 = vunpack.c.l.b16 %v73
    %v755 = vunpack.c.h.b16 %v73
    %v756 = vunpack.c.l.b16 %v74
    %v757 = vunpack.c.h.b16 %v74
    %v758 = vunpack.c.l.b16 %v75
    %v759 = vunpack.c.h.b16 %v75
    %v760 = vunpack.c.l.b16 %v76
    %v761 = vunpack.c.h.b16 %v76
    %v762 = vunpack.c.l.b16 %v77
    %v763 = vunpack.c.h.b16 %v77
    %v764 = vunpack.c.l.b16 %v78
    %v765 = vunpack.c.h.b16 %v78
    %v766 = vunpack.c.l.b16 %v79
    %v767 = vunpack.c.h.b16 %v79
    %v768 = vunpack.c.l.b16 %v80
    %v769 = vunpack.c.h.b16 %v80
    %v770 = vunpack.c.l.b16 %v81
    %v771 = vunpack.c.h.b16 %v81
    %v772 = vunpack.c.l.b16 %v82
    %v773 = vunpack.c.h.b16 %v82
    %v774 = vunpack.c.l.b16 %v83
    %v775 = vunpack.c.h.b16 %v83
    %v776 = vunpack.c.l.b16 %v84
    %v777 = vunpack.c.h.b16 %v84
    %v778 = vunpack.c.l.b16 %v85
    %v779 = vunpack.c.h.b16 %v85
    %v780 = vunpack.c.l.b16 %v86
    %v781 = vunpack.c.h.b16 %v86
    %v782 = vunpack.c.l.b16 %v87
    %v783 = vunpack.c.h.b16 %v87
    %v784 = vunpack.c.l.b16 %v88
    %v785 = vunpack.c.h.b16 %v88
    %v786 = vunpack.c.l.b16 %v89
    %v787 = vunpack.c.h.b16 %v89
    %v788 = vunpack.c.l.b16 %v90
    %v789 = vunpack.c.h.b16 %v90
    %v790 = vunpack.c.l.b16 %v91
    %v791 = vunpack.c.h.b16 %v91
    %v792 = vunpack.c.l.b16 %v92
    %v793 = vunpack.c.h.b16 %v92
    %v794 = vunpack.c.l.b16 %v93
    %v795 = vunpack.c.h.b16 %v93
    %v796 = vunpack.c.l.b16 %v94
    %v797 = vunpack.c.h.b16 %v94
    %v798 = vunpack.c.l.b16 %v95
    %v799 = vunpack.c.h.b16 %v95
    %v800 = vunpack.c.l.b16 %v96
    %v801 = vunpack.c.h.b16 %v96
    %v802 = vunpack.c.l.b16 %v97
    %v803 = vunpack.c.h.b16 %v97
    %v804 = vunpack.c.l.b16 %v98
    %v805 = vunpack.c.h.b16 %v98
    %v806 = vunpack.c.l.b16 %v99
    %v807 = vunpack.c.h.b16 %v99
    %v808 = vunpack.c.l.b16 %v100
    %v809 = vunpack.c.h.b16 %v100
    %v810 = vunpack.c.l.b16 %v101
    %v811 = vunpack.c.h.b16 %v101
    %v812 = vunpack.c.l.b16 %v102
    %v813 = vunpack.c.h.b16 %v102
    %v814 = vunpack.c.l.b16 %v103
    %v815 = vunpack.c.h.b16 %v103
    %v816 = vunpack.c.l.b16 %v104
    %v817 = vunpack.c.h.b16 %v104
    %v818 = vunpack.c.l.b16 %v105
    %v819 = vunpack.c.h.b16 %v105
    %v820 = vunpack.c.l.b16 %v106
    %v821 = vunpack.c.h.b16 %v106
    %v822 = vunpack.c.l.b16 %v107
    %v823 = vunpack.c.h.b16 %v107
    %v824 = vunpack.c.l.b16 %v108
    %v825 = vunpack.c.h.b16 %v108
    %v826 = vunpack.c.l.b16 %v109
    %v827 = vunpack.c.h.b16 %v109
    %v828 = vunpack.c.l.b16 %v110
    %v829 = vunpack.c.h.b16 %v110
    %v830 = vunpack.c.l.b16 %v111
    %v831 = vunpack.c.h.b16 %v111
    %v832 = vunpack.c.l.b16 %v112
    %v833 = vunpack.c.h.b16 %v112
    %v834 = vunpack.c.l.b16 %v113
    %v835 = vunpack.c.h.b16 %v113
    %v836 = vunpack.c.l.b16 %v114
    %v837 = vunpack.c.h.b16 %v114
    %v838 = vunpack.c.l.b16 %v115
    %v839 = vunpack.c.h.b16 %v115
    %v840 = vunpack.c.l.b16 %v116
    %v841 = vunpack.c.h.b16 %v116
    %v842 = vunpack.c.l.b16 %v117
    %v843 = vunpack.c.h.b16 %v117
    %v844 = vunpack.c.l.b16 %v118
    %v845 = vunpack.c.h.b16 %v118
    %v846 = vunpack.c.l.b16 %v119
    %v847 = vunpack.c.h.b16 %v119
    %v848 = vunpack.c.l.b16 %v120
    %v849 = vunpack.c.h.b16 %v120
    %v850 = vunpack.c.l.b16 %v121
    %v851 = vunpack.c.h.b16 %v121
    %v852 = vunpack.c.l.b16 %v122
    %v853 = vunpack.c.h.b16 %v122
    %v854 = vunpack.c.l.b16 %v123
    %v855 = vunpack.c.h.b16 %v123
    %v856 = vunpack.c.l.b16 %v124
    %v857 = vunpack.c.h.b16 %v124
    %v858 = vunpack.c.l.b16 %v125
    %v859 = vunpack.c.h.b16 %v125
    %v860 = vunpack.c.l.b16 %v126
    %v861 = vunpack.c.h.b16 %v126
    %v862 = vunpack.c.l.b16 %v127
    %v863 = vunpack.c.h.b16 %v127
    %v864 = vunpack.c.l.b16 %v128
    %v865 = vunpack.c.h.b16 %v128
    %v866 = vunpack.c.l.b16 %v129
    %v867 = vunpack.c.h.b16 %v129
    %v868 = vunpack.c.l.b16 %v130
    %v869 = vunpack.c.h.b16 %v130
    %v870 = vunpack.c.l.b16 %v131
    %v871 = vunpack.c.h.b16 %v131
    %v872 = vunpack.c.l.b16 %v132
    %v873 = vunpack.c.h.b16 %v132
    %v874 = vunpack.c.l.b16 %v133
    %v875 = vunpack.c.h.b16 %v133
    %v876 = vunpack.c.l.b16 %v134
    %v877 = vunpack.c.h.b16 %v134
    %v878 = vunpack.c.l.b16 %v135
    %v879 = vunpack.c.h.b16 %v135
    %v880 = vunpack.c.l.b16 %v136
    %v881 = vunpack.c.h.b16 %v136
    %v882 = vunpack.c.l.b16 %v137
    %v883 = vunpack.c.h.b16 %v137
    %v884 = vunpack.c.l.b16 %v138
    %v885 = vunpack.c.h.b16 %v138
    %v886 = vunpack.c.l.b16 %v139
    %v887 = vunpack.c.h.b16 %v139
    %v888 = vunpack.c.l.b16 %v140
    %v889 = vunpack.c.h.b16 %v140
    %v890 = vunpack.c.l.b16 %v141
    %v891 = vunpack.c.h.b16 %v141
    %v892 = vunpack.c.l.b16 %v142
    %v893 = vunpack.c.h.b16 %v142
    %v894 = vunpack.c.l.b16 %v143
    %v895 = vunpack.c.h.b16 %v143
    %v896 = vunpack.c.l.b16 %v144
    %v897 = vunpack.c.h.b16 %v144
    %v898 = vunpack.c.l.b16 %v145
    %v899 = vunpack.c.h.b16 %v145
    %v900 = vunpack.c.l.b16 %v146
    %v901 = vunpack.c.h.b16 %v146
    %v902 = vunpack.c.l.b16 %v147
    %v903 = vunpack.c.h.b16 %v147
    %v904 = vunpack.c.l.b16 %v148
    %v905 = vunpack.c.h.b16 %v148
    %v906 = vunpack.c.l.b16 %v149
    %v907 = vunpack.c.h.b16 %v149
    %v908 = vunpack.c.l.b16 %v150
    %v909 = vunpack.c.h.b16 %v150
    %v910 = vunpack.c.l.b16 %v151
    %v911 = vunpack.c.h.b16 %v151
    %v912 = vunpack.c.l.b16 %v152
    %v913 = vunpack.c.h.b16 %v152
    %v914 = vunpack.c.l.b16 %v153
    %v915 = vunpack.c.h.b16 %v153
    %v916 = vunpack.c.l.b16 %v154
    %v917 = vunpack.c.h.b16 %v154
    %v918 = vunpack.c.l.b16 %v155
    %v919 = vunpack.c.h.b16 %v155
    %v920 = vunpack.c.l.b16 %v156
    %v921 = vunpack.c.h.b16 %v156
    %v922 = vunpack.c.l.b16 %v157
    %v923 = vunpack.c.h.b16 %v157
    %v924 = vunpack.c.l.b16 %v158
    %v925 = vunpack.c.h.b16 %v158
    %v926 = vunpack.c.l.b16 %v159
    %v927 = vunpack.c.h.b16 %v159
    %v928 = vunpack.c.l.b16 %v160
    %v929 = vunpack.c.h.b16 %v160
    %v930 = vunpack.c.l.b16 %v161
    %v931 = vunpack.c.h.b16 %v161
    %v932 = vunpack.c.l.b16 %v162
    %v933 = vunpack.c.h.b16 %v162
    %v934 = vunpack.c.l.b16 %v163
    %v935 = vunpack.c.h.b16 %v163
    %v936 = vunpack.c.l.b16 %v164
    %v937 = vunpack.c.h.b16 %v164
    %v938 = vunpack.c.l.b16 %v165
    %v939 = vunpack.c.h.b16 %v165
    %v940 = vunpack.c.l.b16 %v166
    %v941 = vunpack.c.h.b16 %v166
    %v942 = vunpack.c.l.b16 %v167
    %v943 = vunpack.c.h.b16 %v167
    %v944 = vunpack.c.l.b16 %v168
    %v945 = vunpack.c.h.b16 %v168
    %v946 = vunpack.c.l.b16 %v169
    %v947 = vunpack.c.h.b16 %v169
    %v948 = vunpack.c.l.b16 %v170
    %v949 = vunpack.c.h.b16 %v170
    %v950 = vunpack.c.l.b16 %v171
    %v951 = vunpack.c.h.b16 %v171
    %v952 = vunpack.c.l.b16 %v172
    %v953 = vunpack.c.h.b16 %v172
    %v954 = vunpack.c.l.b16 %v173
    %v955 = vunpack.c.h.b16 %v173
    %v956 = vunpack.c.l.b16 %v174
    %v957 = vunpack.c.h.b16 %v174
    %v958 = vunpack.c.l.b16 %v175
    %v959 = vunpack.c.h.b16 %v175
    %v960 = vunpack.c.l.b16 %v176
    %v961 = vunpack.c.h.b16 %v176
    %v962 = vunpack.c.l.b16 %v177
    %v963 = vunpack.c.h.b16 %v177
    %v964 = vunpack.c.l.b16 %v178
    %v965 = vunpack.c.h.b16 %v178
    %v966 = vunpack.c.l.b16 %v179
    %v967 = vunpack.c.h.b16 %v179
    %v968 = vunpack.c.l.b16 %v180
    %v969 = vunpack.c.h.b16 %v180
    %v970 = vunpack.c.l.b16 %v181
    %v971 = vunpack.c.h.b16 %v181
    %v972 = vunpack.c.l.b16 %v182
    %v973 = vunpack.c.h.b16 %v182
    %v974 = vunpack.c.l.b16 %v183
    %v975 = vunpack.c.h.b16 %v183
    %v976 = vunpack.c.l.b16 %v184
    %v977 = vunpack.c.h.b16 %v184
    %v978 = vunpack.c.l.b16 %v185
    %v979 = vunpack.c.h.b16 %v185
    %v980 = vunpack.c.l.b16 %v186
    %v981 = vunpack.c.h.b16 %v186
    %v982 = vunpack.c.l.b16 %v187
    %v983 = vunpack.c.h.b16 %v187
    %v984 = vunpack.c.l.b16 %v188
    %v985 = vunpack.c.h.b16 %v188
    %v986 = vunpack.c.l.b16 %v189
    %v987 = vunpack.c.h.b16 %v189
    %v988 = vunpack.c.l.b16 %v190
    %v989 = vunpack.c.h.b16 %v190
    %v990 = vunpack.c.l.b16 %v191
    %v991 = vunpack.c.h.b16 %v191
    %v992 = vunpack.c.l.b16 %v192
    %v993 = vunpack.c.h.b16 %v192
    %v994 = vunpack.c.l.b16 %v193
    %v995 = vunpack.c.h.b16 %v193
    %v996 = vunpack.c.l.b16 %v194
    %v997 = vunpack.c.h.b16 %v194
    %v998 = vunpack.c.l.b16 %v195
    %v999 = vunpack.c.h.b16 %v195
    %v1000 = vunpack.c.l.b16 %v196
    %v1001 = vunpack.c.h.b16 %v196
    %v1002 = vunpack.c.l.b16 %v197
    %v1003 = vunpack.c.h.b16 %v197
    %v1004 = vunpack.c.l.b16 %v198
    %v1005 = vunpack.c.h.b16 %v198
    %v1006 = vunpack.c.l.b16 %v199
    %v1007 = vunpack.c.h.b16 %v199
    %v1008 = vunpack.c.l.b16 %v200
    %v1009 = vunpack.c.h.b16 %v200
    %v1010 = vunpack.c.l.b16 %v201
    %v1011 = vunpack.c.h.b16 %v201
    %v1012 = vunpack.c.l.b16 %v202
    %v1013 = vunpack.c.h.b16 %v202
    %v1014 = vunpack.c.l.b16 %v203
    %v1015 = vunpack.c.h.b16 %v203
    %v1016 = vunpack.c.l.b16 %v204
    %v1017 = vunpack.c.h.b16 %v204
    %v1018 = vunpack.c.l.b16 %v205
    %v1019 = vunpack.c.h.b16 %v205
    %v1020 = vunpack.c.l.b16 %v206
    %v1021 = vunpack.c.h.b16 %v206
    %v1022 = vunpack.c.l.b16 %v207
    %v1023 = vunpack.c.h.b16 %v207
    %v1024 = vunpack.c.l.b16 %v208
    %v1025 = vunpack.c.h.b16 %v208
    %v1026 = vunpack.c.l.b16 %v209
    %v1027 = vunpack.c.h.b16 %v209
    %v1028 = vunpack.c.l.b16 %v210
    %v1029 = vunpack.c.h.b16 %v210
    %v1030 = vunpack.c.l.b16 %v211
    %v1031 = vunpack.c.h.b16 %v211
    %v1032 = vunpack.c.l.b16 %v212
    %v1033 = vunpack.c.h.b16 %v212
    %v1034 = vunpack.c.l.b16 %v213
    %v1035 = vunpack.c.h.b16 %v213
    %v1036 = vunpack.c.l.b16 %v214
    %v1037 = vunpack.c.h.b16 %v214
    %v1038 = vunpack.c.l.b16 %v215
    %v1039 = vunpack.c.h.b16 %v215
    %v1040 = vunpack.c.l.b16 %v216
    %v1041 = vunpack.c.h.b16 %v216
    %v1042 = vunpack.c.l.b16 %v217
    %v1043 = vunpack.c.h.b16 %v217
    %v1044 = vunpack.c.l.b16 %v218
    %v1045 = vunpack.c.h.b16 %v218
    %v1046 = vunpack.c.l.b16 %v219
    %v1047 = vunpack.c.h.b16 %v219
    %v1048 = vunpack.c.l.b16 %v220
    %v1049 = vunpack.c.h.b16 %v220
    %v1050 = vunpack.c.l.b16 %v221
    %v1051 = vunpack.c.h.b16 %v221
    %v1052 = vunpack.c.l.b16 %v222
    %v1053 = vunpack.c.h.b16 %v222
    %v1054 = vunpack.c.l.b16 %v223
    %v1055 = vunpack.c.h.b16 %v223
    %v1056 = vunpack.c.l.b16 %v224
    %v1057 = vunpack.c.h.b16 %v224
    %v1058 = vunpack.c.l.b16 %v225
    %v1059 = vunpack.c.h.b16 %v225
    %v1060 = vunpack.c.l.b16 %v226
    %v1061 = vunpack.c.h.b16 %v226
    %v1062 = vunpack.c.l.b16 %v227
    %v1063 = vunpack.c.h.b16 %v227
    %v1064 = vunpack.c.l.b16 %v228
    %v1065 = vunpack.c.h.b16 %v228
    %v1066 = vunpack.c.l.b16 %v229
    %v1067 = vunpack.c.h.b16 %v229
    %v1068 = vunpack.c.l.b16 %v230
    %v1069 = vunpack.c.h.b16 %v230
    %v1070 = vunpack.c.l.b16 %v231
    %v1071 = vunpack.c.h.b16 %v231
    %v1072 = vunpack.c.l.b16 %v232
    %v1073 = vunpack.c.h.b16 %v232
    %v1074 = vunpack.c.l.b16 %v233
    %v1075 = vunpack.c.h.b16 %v233
    %v1076 = vunpack.c.l.b16 %v234
    %v1077 = vunpack.c.h.b16 %v234
    %v1078 = vunpack.c.l.b16 %v235
    %v1079 = vunpack.c.h.b16 %v235
    %v1080 = vunpack.c.l.b16 %v236
    %v1081 = vunpack.c.h.b16 %v236
    %v1082 = vunpack.c.l.b16 %v237
    %v1083 = vunpack.c.h.b16 %v237
    %v1084 = vunpack.c.l.b16 %v238
    %v1085 = vunpack.c.h.b16 %v238
    %v1086 = vunpack.c.l.b16 %v239
    %v1087 = vunpack.c.h.b16 %v239
    %v1088 = vunpack.c.l.b16 %v240
    %v1089 = vunpack.c.h.b16 %v240
    %v1090 = vunpack.c.l.b16 %v241
    %v1091 = vunpack.c.h.b16 %v241
    %v1092 = vunpack.c.l.b16 %v242
    %v1093 = vunpack.c.h.b16 %v242
    %v1094 = vunpack.c.l.b16 %v243
    %v1095 = vunpack.c.h.b16 %v243
    %v1096 = vunpack.c.l.b16 %v244
    %v1097 = vunpack.c.h.b16 %v244
    %v1098 = vunpack.c.l.b16 %v245
    %v1099 = vunpack.c.h.b16 %v245
    %v1100 = vunpack.c.l.b16 %v246
    %v1101 = vunpack.c.h.b16 %v246
    %v1102 = vunpack.c.l.b16 %v247
    %v1103 = vunpack.c.h.b16 %v247
    %v1104 = vunpack.c.l.b16 %v248
    %v1105 = vunpack.c.h.b16 %v248
    %v1106 = vunpack.c.l.b16 %v249
    %v1107 = vunpack.c.h.b16 %v249
    %v1108 = vunpack.c.l.b16 %v250
    %v1109 = vunpack.c.h.b16 %v250
    %v1110 = vunpack.c.l.b16 %v251
    %v1111 = vunpack.c.h.b16 %v251
    %v1112 = vunpack.c.l.b16 %v252
    %v1113 = vunpack.c.h.b16 %v252
    %v1114 = vunpack.c.l.b16 %v253
    %v1115 = vunpack.c.h.b16 %v253
    %v1116 = vunpack.c.l.b16 %v254
    %v1117 = vunpack.c.h.b16 %v254
    %v1118 = vunpack.c.l.b16 %v255
    %v1119 = vunpack.c.h.b16 %v255
    %v1120 = vunpack.c.l.b16 %v256
    %v1121 = vunpack.c.h.b16 %v256
    %v1122 = vunpack.c.l.b16 %v257
    %v1123 = vunpack.c.h.b16 %v257
    %v1124 = vunpack.c.l.b16 %v258
    %v1125 = vunpack.c.h.b16 %v258
    %v1126 = vunpack.c.l.b16 %v259
    %v1127 = vunpack.c.h.b16 %v259
    %v1128 = vunpack.c.l.b16 %v260
    %v1129 = vunpack.c.h.b16 %v260
    %v1130 = vunpack.c.l.b16 %v261
    %v1131 = vunpack.c.h.b16 %v261
    %v1132 = vunpack.c.l.b16 %v262
    %v1133 = vunpack.c.h.b16 %v262
    %v1134 = vunpack.c.l.b16 %v263
    %v1135 = vunpack.c.h.b16 %v263
    %v1136 = vunpack.c.l.b16 %v264
    %v1137 = vunpack.c.h.b16 %v264
    %v1138 = vunpack.c.l.b16 %v265
    %v1139 = vunpack.c.h.b16 %v265
    %v1140 = vunpack.c.l.b16 %v266
    %v1141 = vunpack.c.h.b16 %v266
    %v1142 = vunpack.c.l.b16 %v267
    %v1143 = vunpack.c.h.b16 %v267
    %v1144 = vunpack.c.l.b16 %v268
    %v1145 = vunpack.c.h.b16 %v268
    %v1146 = vunpack.c.l.b16 %v269
    %v1147 = vunpack.c.h.b16 %v269
    %v1148 = vunpack.c.l.b16 %v270
    %v1149 = vunpack.c.h.b16 %v270
    %v1150 = vunpack.c.l.b16 %v271
    %v1151 = vunpack.c.h.b16 %v271
    %v1152 = vunpack.c.l.b16 %v272
    %v1153 = vunpack.c.h.b16 %v272
    %v1154 = vunpack.c.l.b16 %v273
    %v1155 = vunpack.c.h.b16 %v273
    %v1156 = vunpack.c.l.b16 %v274
    %v1157 = vunpack.c.h.b16 %v274
    %v1158 = vunpack.c.l.b16 %v275
    %v1159 = vunpack.c.h.b16 %v275
    %v1160 = vunpack.c.l.b16 %v276
    %v1161 = vunpack.c.h.b16 %v276
    %v1162 = vunpack.c.l.b16 %v277
    %v1163 = vunpack.c.h.b16 %v277
    %v1164 = vunpack.c.l.b16 %v278
    %v1165 = vunpack.c.h.b16 %v278
    %v1166 = vunpack.c.l.b16 %v279
    %v1167 = vunpack.c.h.b16 %v279
    %v1168 = vunpack.c.l.b16 %v280
    %v1169 = vunpack.c.h.b16 %v280
    %v1170 = vunpack.c.l.b16 %v281
    %v1171 = vunpack.c.h.b16 %v281
    %v1172 = vunpack.c.l.b16 %v282
    %v1173 = vunpack.c.h.b16 %v282
    %v1174 = vunpack.c.l.b16 %v283
    %v1175 = vunpack.c.h.b16 %v283
    %v1176 = vunpack.c.l.b16 %v284
    %v1177 = vunpack.c.h.b16 %v284
    %v1178 = vunpack.c.l.b16 %v285
    %v1179 = vunpack.c.h.b16 %v285
    %v1180 = vunpack.c.l.b16 %v286
    %v1181 = vunpack.c.h.b16 %v286
    %v1182 = vunpack.c.l.b16 %v287
    %v1183 = vunpack.c.h.b16 %v287
    %v1184 = vunpack.c.l.b16 %v288
    %v1185 = vunpack.c.h.b16 %v288
    %v1186 = vunpack.c.l.b16 %v289
    %v1187 = vunpack.c.h.b16 %v289
    %v1188 = vunpack.c.l.b16 %v290
    %v1189 = vunpack.c.h.b16 %v290
    %v1190 = vunpack.c.l.b16 %v291
    %v1191 = vunpack.c.h.b16 %v291
    %v1192 = vunpack.c.l.b16 %v292
    %v1193 = vunpack.c.h.b16 %v292
    %v1194 = vunpack.c.l.b16 %v293
    %v1195 = vunpack.c.h.b16 %v293
    %v1196 = vunpack.c.l.b16 %v294
    %v1197 = vunpack.c.h.b16 %v294
    %v1198 = vunpack.c.l.b16 %v295
    %v1199 = vunpack.c.h.b16 %v295
    %v1200 = vunpack.c.l.b16 %v296
    %v1201 = vunpack.c.h.b16 %v296
    %v1202 = vunpack.c.l.b16 %v297
    %v1203 = vunpack.c.h.b16 %v297
    %v1204 = vunpack.c.l.b16 %v298
    %v1205 = vunpack.c.h.b16 %v298
    %v1206 = vunpack.c.l.b16 %v299
    %v1207 = vunpack.c.h.b16 %v299
    %v1208 = vunpack.c.l.b16 %v300
    %v1209 = vunpack.c.h.b16 %v300
    %v1210 = vunpack.c.l.b16 %v301
    %v1211 = vunpack.c.h.b16 %v301
    %v1212 = vunpack.c.l.b16 %v302
    %v1213 = vunpack.c.h.b16 %v302
    %v1214 = vunpack.c.l.b16 %v303
    %v1215 = vunpack.c.h.b16 %v303
    %v1216 = vunpack.c.l.b16 %v304
    %v1217 = vunpack.c.h.b16 %v304
    %v1218 = vunpack.c.l.b16 %v305
    %v1219 = vunpack.c.h.b16 %v305
    %v1220 = vunpack.c.l.b16 %v306
    %v1221 = vunpack.c.h.b16 %v306
    %v1222 = vunpack.c.l.b16 %v307
    %v1223 = vunpack.c.h.b16 %v307
    %v1224 = vunpack.c.l.b16 %v308
    %v1225 = vunpack.c.h.b16 %v308
    %v1226 = vunpack.c.l.b16 %v309
    %v1227 = vunpack.c.h.b16 %v309
    %v1228 = vunpack.c.l.b16 %v310
    %v1229 = vunpack.c.h.b16 %v310
    %v1230 = vunpack.c.l.b16 %v311
    %v1231 = vunpack.c.h.b16 %v311
    %v1232 = vunpack.c.l.b16 %v312
    %v1233 = vunpack.c.h.b16 %v312
    %v1234 = vunpack.c.l.b16 %v313
    %v1235 = vunpack.c.h.b16 %v313
    %v1236 = vunpack.c.l.b16 %v314
    %v1237 = vunpack.c.h.b16 %v314
    %v1238 = vunpack.c.l.b16 %v315
    %v1239 = vunpack.c.h.b16 %v315
    %v1240 = vunpack.c.l.b16 %v316
    %v1241 = vunpack.c.h.b16 %v316
    %v1242 = vunpack.c.l.b16 %v317
    %v1243 = vunpack.c.h.b16 %v317
    %v1244 = vpack.c.b16 %v674, %v668
    %v1245 = vpack.c.b16 %v675, %v669
    %v1246 = vpack.c.b16 %v676, %v670
    %v1247 = vpack.c.b16 %v677, %v671
    %v1248 = vpack.c.b16 %v678, %v672
    %v1249 = vpack.c.b16 %v679, %v673
    %v1250 = vpack.c.b16 %v686, %v680
    %v1251 = vpack.c.b16 %v687, %v681
    %v1252 = vpack.c.b16 %v688, %v682
    %v1253 = vpack.c.b16 %v689, %v683
    %v1254 = vpack.c.b16 %v690, %v684
    %v1255 = vpack.c.b16 %v691, %v685
    %v1256 = vpack.c.b16 %v698, %v692
    %v1257 = vpack.c.b16 %v699, %v693
    %v1258 = vpack.c.b16 %v700, %v694
    %v1259 = vpack.c.b16 %v701, %v695
    %v1260 = vpack.c.b16 %v702, %v696
    %v1261 = vpack.c.b16 %v703, %v697
    %v1262 = vpack.c.b16 %v710, %v704
    %v1263 = vpack.c.b16 %v711, %v705
    %v1264 = vpack.c.b16 %v712, %v706
    %v1265 = vpack.c.b16 %v713, %v707
    %v1266 = vpack.c.b16 %v714, %v708
    %v1267 = vpack.c.b16 %v715, %v709
    %v1268 = vpack.c.b16 %v722, %v716
    %v1269 = vpack.c.b16 %v723, %v717
    %v1270 = vpack.c.b16 %v724, %v718
    %v1271 = vpack.c.b16 %v725, %v719
    %v1272 = vpack.c.b16 %v726, %v720
    %v1273 = vpack.c.b16 %v727, %v721
    %v1274 = vpack.c.b16 %v734, %v728
    %v1275 = vpack.c.b16 %v735, %v729
    %v1276 = vpack.c.b16 %v736, %v730
    %v1277 = vpack.c.b16 %v737, %v731
    %v1278 = vpack.c.b16 %v738, %v732
    %v1279 = vpack.c.b16 %v739, %v733
    %v1280 = vpack.c.b16 %v746, %v740
    %v1281 = vpack.c.b16 %v747, %v741
    %v1282 = vpack.c.b16 %v748, %v742
    %v1283 = vpack.c.b16 %v749, %v743
    %v1284 = vpack.c.b16 %v750, %v744
    %v1285 = vpack.c.b16 %v751, %v745
    %v1286 = vpack.c.b16 %v758, %v752
    %v1287 = vpack.c.b16 %v759, %v753
    %v1288 = vpack.c.b16 %v760, %v754
    %v1289 = vpack.c.b16 %v761, %v755
    %v1290 = vpack.c.b16 %v762, %v756
    %v1291 = vpack.c.b16 %v763, %v757
    %v1292 = vpack.c.b16 %v770, %v764
    %v1293 = vpack.c.b16 %v771, %v765
    %v1294 = vpack.c.b16 %v772, %v766
    %v1295 = vpack.c.b16 %v773, %v767
    %v1296 = vpack.c.b16 %v774, %v768
    %v1297 = vpack.c.b16 %v775, %v769
    %v1298 = vpack.c.b16 %v782, %v776
    %v1299 = vpack.c.b16 %v783, %v777
    %v1300 = vpack.c.b16 %v784, %v778
    %v1301 = vpack.c.b16 %v785, %v779
    %v1302 = vpack.c.b16 %v786, %v780
    %v1303 = vpack.c.b16 %v787, %v781
    %v1304 = vpack.c.b16 %v794, %v788
    %v1305 = vpack.c.b16 %v795, %v789
    %v1306 = vpack.c.b16 %v796, %v790
    %v1307 = vpack.c.b16 %v797, %v791
    %v1308 = vpack.c.b16 %v798, %v792
    %v1309 = vpack.c.b16 %v799, %v793
    %v1310 = vpack.c.b16 %v806, %v800
    %v1311 = vpack.c.b16 %v807, %v801
    %v1312 = vpack.c.b16 %v808, %v802
    %v1313 = vpack.c.b16 %v809, %v803
    %v1314 = vpack.c.b16 %v810, %v804
    %v1315 = vpack.c.b16 %v811, %v805
    %v1316 = vpack.c.b16 %v818, %v812
    %v1317 = vpack.c.b16 %v819, %v813
    %v1318 = vpack.c.b16 %v820, %v814
    %v1319 = vpack.c.b16 %v821, %v815
    %v1320 = vpack.c.b16 %v822, %v816
    %v1321 = vpack.c.b16 %v823, %v817
    %v1322 = vpack.c.b16 %v830, %v824
    %v1323 = vpack.c.b16 %v831, %v825
    %v1324 = vpack.c.b16 %v832, %v826
    %v1325 = vpack.c.b16 %v833, %v827
    %v1326 = vpack.c.b16 %v834, %v828
    %v1327 = vpack.c.b16 %v835, %v829
    %v1328 = vpack.c.b16 %v842, %v836
    %v1329 = vpack.c.b16 %v843, %v837
    %v1330 = vpack.c.b16 %v844, %v838
    %v1331 = vpack.c.b16 %v845, %v839
    %v1332 = vpack.c.b16 %v846, %v840
    %v1333 = vpack.c.b16 %v847, %v841
    %v1334 = vpack.c.b16 %v854, %v848
    %v1335 = vpack.c.b16 %v855, %v849
    %v1336 = vpack.c.b16 %v856, %v850
    %v1337 = vpack.c.b16 %v857, %v851
    %v1338 = vpack.c.b16 %v858, %v852
    %v1339 = vpack.c.b16 %v859, %v853
    %v1340 = vpack.c.b16 %v866, %v860
    %v1341 = vpack.c.b16 %v867, %v861
    %v1342 = vpack.c.b16 %v868, %v862
    %v1343 = vpack.c.b16 %v869, %v863
    %v1344 = vpack.c.b16 %v870, %v864
    %v1345 = vpack.c.b16 %v871, %v865
    %v1346 = vpack.c.b16 %v878, %v872
    %v1347 = vpack.c.b16 %v879, %v873
    %v1348 = vpack.c.b16 %v880, %v874
    %v1349 = vpack.c.b16 %v881, %v875
    %v1350 = vpack.c.b16 %v882, %v876
    %v1351 = vpack.c.b16 %v883, %v877
    %v1352 = vpack.c.b16 %v890, %v884
    %v1353 = vpack.c.b16 %v891, %v885
    %v1354 = vpack.c.b16 %v892, %v886
    %v1355 = vpack.c.b16 %v893, %v887
    %v1356 = vpack.c.b16 %v894, %v888
    %v1357 = vpack.c.b16 %v895, %v889
    %v1358 = vpack.c.b16 %v902, %v896
    %v1359 = vpack.c.b16 %v903, %v897
    %v1360 = vpack.c.b16 %v904, %v898
    %v1361 = vpack.c.b16 %v905, %v899
    %v1362 = vpack.c.b16 %v906, %v900
    %v1363 = vpack.c.b16 %v907, %v901
    %v1364 = vpack.c.b16 %v914, %v908
    %v1365 = vpack.c.b16 %v915, %v909
    %v1366 = vpack.c.b16 %v916, %v910
    %v1367 = vpack.c.b16 %v917, %v911
    %v1368 = vpack.c.b16 %v918, %v912
    %v1369 = vpack.c.b16 %v919, %v913
    %v1370 = vpack.c.b16 %v926, %v920
    %v1371 = vpack.c.b16 %v927, %v921
    %v1372 = vpack.c.b16 %v928, %v922
    %v1373 = vpack.c.b16 %v929, %v923
    %v1374 = vpack.c.b16 %v930, %v924
    %v1375 = vpack.c.b16 %v931, %v925
    %v1376 = vpack.c.b16 %v938, %v932
    %v1377 = vpack.c.b16 %v939, %v933
    %v1378 = vpack.c.b16 %v940, %v934
    %v1379 = vpack.c.b16 %v941, %v935
    %v1380 = vpack.c.b16 %v942, %v936
    %v1381 = vpack.c.b16 %v943, %v937
    %v1382 = vpack.c.b16 %v950, %v944
    %v1383 = vpack.c.b16 %v951, %v945
    %v1384 = vpack.c.b16 %v952, %v946
    %v1385 = vpack.c.b16 %v953, %v947
    %v1386 = vpack.c.b16 %v954, %v948
    %v1387 = vpack.c.b16 %v955, %v949
    %v1388 = vpack.c.b16 %v962, %v956
    %v1389 = vpack.c.b16 %v963, %v957
    %v1390 = vpack.c.b16 %v964, %v958
    %v1391 = vpack.c.b16 %v965, %v959
    %v1392 = vpack.c.b16 %v966, %v960
    %v1393 = vpack.c.b16 %v967, %v961
    %v1394 = vpack.c.b16 %v974, %v968
    %v1395 = vpack.c.b16 %v975, %v969
    %v1396 = vpack.c.b16 %v976, %v970
    %v1397 = vpack.c.b16 %v977, %v971
    %v1398 = vpack.c.b16 %v978, %v972
    %v1399 = vpack.c.b16 %v979, %v973
    %v1400 = vpack.c.b16 %v986, %v980
    %v1401 = vpack.c.b16 %v987, %v981
    %v1402 = vpack.c.b16 %v988, %v982
    %v1403 = vpack.c.b16 %v989, %v983
    %v1404 = vpack.c.b16 %v990, %v984
    %v1405 = vpack.c.b16 %v991, %v985
    %v1406 = vpack.c.b16 %v998, %v992
    %v1407 = vpack.c.b16 %v999, %v993
    %v1408 = vpack.c.b16 %v1000, %v994
    %v1409 = vpack.c.b16 %v1001, %v995
    %v1410 = vpack.c.b16 %v1002, %v996
    %v1411 = vpack.c.b16 %v1003, %v997
    %v1412 = vpack.c.b16 %v1010, %v1004
    %v1413 = vpack.c.b16 %v1011, %v1005
    %v1414 = vpack.c.b16 %v1012, %v1006
    %v1415 = vpack.c.b16 %v1013, %v1007
    %v1416 = vpack.c.b16 %v1014, %v1008
    %v1417 = vpack.c.b16 %v1015, %v1009
    %v1418 = vpack.c.b16 %v1022, %v1016
    %v1419 = vpack.c.b16 %v1023, %v1017
    %v1420 = vpack.c.b16 %v1024, %v1018
    %v1421 = vpack.c.b16 %v1025, %v1019
    %v1422 = vpack.c.b16 %v1026, %v1020
    %v1423 = vpack.c.b16 %v1027, %v1021
    %v1424 = vpack.c.b16 %v1034, %v1028
    %v1425 = vpack.c.b16 %v1035, %v1029
    %v1426 = vpack.c.b16 %v1036, %v1030
    %v1427 = vpack.c.b16 %v1037, %v1031
    %v1428 = vpack.c.b16 %v1038, %v1032
    %v1429 = vpack.c.b16 %v1039, %v1033
    %v1430 = vpack.c.b16 %v1046, %v1040
    %v1431 = vpack.c.b16 %v1047, %v1041
    %v1432 = vpack.c.b16 %v1048, %v1042
    %v1433 = vpack.c.b16 %v1049, %v1043
    %v1434 = vpack.c.b16 %v1050, %v1044
    %v1435 = vpack.c.b16 %v1051, %v1045
    %v1436 = vpack.c.b16 %v1058, %v1052
    %v1437 = vpack.c.b16 %v1059, %v1053
    %v1438 = vpack.c.b16 %v1060, %v1054
    %v1439 = vpack.c.b16 %v1061, %v1055
    %v1440 = vpack.c.b16 %v1062, %v1056
    %v1441 = vpack.c.b16 %v1063, %v1057
    %v1442 = vpack.c.b16 %v1070, %v1064
    %v1443 = vpack.c.b16 %v1071, %v1065
    %v1444 = vpack.c.b16 %v1072, %v1066
    %v1445 = vpack.c.b16 %v1073, %v1067
    %v1446 = vpack.c.b16 %v1074, %v1068
    %v1447 = vpack.c.b16 %v1075, %v1069
    %v1448 = vpack.c.b16 %v1082, %v1076
    %v1449 = vpack.c.b16 %v1083, %v1077
    %v1450 = vpack.c.b16 %v1084, %v1078
    %v1451 = vpack.c.b16 %v1085, %v1079
    %v1452 = vpack.c.b16 %v1086, %v1080
    %v1453 = vpack.c.b16 %v1087, %v1081
    %v1454 = vpack.c.b16 %v1094, %v1088
    %v1455 = vpack.c.b16 %v1095, %v1089
    %v1456 = vpack.c.b16 %v1096, %v1090
    %v1457 = vpack.c.b16 %v1097, %v1091
    %v1458 = vpack.c.b16 %v1098, %v1092
    %v1459 = vpack.c.b16 %v1099, %v1093
    %v1460 = vpack.c.b16 %v1106, %v1100
    %v1461 = vpack.c.b16 %v1107, %v1101
    %v1462 = vpack.c.b16 %v1108, %v1102
    %v1463 = vpack.c.b16 %v1109, %v1103
    %v1464 = vpack.c.b16 %v1110, %v1104
    %v1465 = vpack.c.b16 %v1111, %v1105
    %v1466 = vpack.c.b16 %v1118, %v1112
    %v1467 = vpack.c.b16 %v1119, %v1113
    %v1468 = vpack.c.b16 %v1120, %v1114
    %v1469 = vpack.c.b16 %v1121, %v1115
    %v1470 = vpack.c.b16 %v1122, %v1116
    %v1471 = vpack.c.b16 %v1123, %v1117
    %v1472 = vpack.c.b16 %v1130, %v1124
    %v1473 = vpack.c.b16 %v1131, %v1125
    %v1474 = vpack.c.b16 %v1132, %v1126
    %v1475 = vpack.c.b16 %v1133, %v1127
    %v1476 = vpack.c.b16 %v1134, %v1128
    %v1477 = vpack.c.b16 %v1135, %v1129
    %v1478 = vpack.c.b16 %v1142, %v1136
    %v1479 = vpack.c.b16 %v1143, %v1137
    %v1480 = vpack.c.b16 %v1144, %v1138
    %v1481 = vpack.c.b16 %v1145, %v1139
    %v1482 = vpack.c.b16 %v1146, %v1140
    %v1483 = vpack.c.b16 %v1147, %v1141
    %v1484 = vpack.c.b16 %v1154, %v1148
    %v1485 = vpack.c.b16 %v1155, %v1149
    %v1486 = vpack.c.b16 %v1156, %v1150
    %v1487 = vpack.c.b16 %v1157, %v1151
    %v1488 = vpack.c.b16 %v1158, %v1152
    %v1489 = vpack.c.b16 %v1159, %v1153
    %v1490 = vpack.c.b16 %v1166, %v1160
    %v1491 = vpack.c.b16 %v1167, %v1161
    %v1492 = vpack.c.b16 %v1168, %v1162
    %v1493 = vpack.c.b16 %v1169, %v1163
    %v1494 = vpack.c.b16 %v1170, %v1164
    %v1495 = vpack.c.b16 %v1171, %v1165
    %v1496 = vpack.c.b16 %v1178, %v1172
    %v1497 = vpack.c.b16 %v1179, %v1173
    %v1498 = vpack.c.b16 %v1180, %v1174
    %v1499 = vpack.c.b16 %v1181, %v1175
    %v1500 = vpack.c.b16 %v1182, %v1176
    %v1501 = vpack.c.b16 %v1183, %v1177
    %v1502 = vpack.c.b16 %v1190, %v1184
    %v1503 = vpack.c.b16 %v1191, %v1185
    %v1504 = vpack.c.b16 %v1192, %v1186
    %v1505 = vpack.c.b16 %v1193, %v1187
    %v1506 = vpack.c.b16 %v1194, %v1188
    %v1507 = vpack.c.b16 %v1195, %v1189
    %v1508 = vpack.c.b16 %v1202, %v1196
    %v1509 = vpack.c.b16 %v1203, %v1197
    %v1510 = vpack.c.b16 %v1204, %v1198
    %v1511 = vpack.c.b16 %v1205, %v1199
    %v1512 = vpack.c.b16 %v1206, %v1200
    %v1513 = vpack.c.b16 %v1207, %v1201
    %v1514 = vpack.c.b16 %v1214, %v1208
    %v1515 = vpack.c.b16 %v1215, %v1209
    %v1516 = vpack.c.b16 %v1216, %v1210
    %v1517 = vpack.c.b16 %v1217, %v1211
    %v1518 = vpack.c.b16 %v1218, %v1212
    %v1519 = vpack.c.b16 %v1219, %v1213
    %v1520 = vpack.c.b16 %v1226, %v1220
    %v1521 = vpack.c.b16 %v1227, %v1221
    %v1522 = vpack.c.b16 %v1228, %v1222
    %v1523 = vpack.c.b16 %v1229, %v1223
    %v1524 = vpack.c.b16 %v1230, %v1224
    %v1525 = vpack.c.b16 %v1231, %v1225
    %v1526 = vpack.c.b16 %v1238, %v1232
    %v1527 = vpack.c.b16 %v1239, %v1233
    %v1528 = vpack.c.b16 %v1240, %v1234
    %v1529 = vpack.c.b16 %v1241, %v1235
    %v1530 = vpack.c.b16 %v1242, %v1236
    %v1531 = vpack.c.b16 %v1243, %v1237
    %1820 = vmatprep.subr.bf16.mxu0 %v1287
    %1821 = vmatpush1.bf16.msra.mxu0 %v1286
    %1822 = vmatprep.subr.bf16.mxu0 %v1281
    %1823 = vmatpush1.bf16.msra.mxu0 %v1280
    %1824 = vmatprep.subr.bf16.mxu0 %v1275
    %1825 = vmatpush1.bf16.msra.mxu0 %v1274
    %1826 = vmatprep.subr.bf16.mxu0 %v1269
    %1827 = vmatpush1.bf16.msra.mxu0 %v1268
    %1828 = vmatprep.subr.bf16.mxu0 %v1263
    %1829 = vmatpush1.bf16.msra.mxu0 %v1262
    %1830 = vmatprep.subr.bf16.mxu0 %v1257
    %1831 = vmatpush1.bf16.msra.mxu0 %v1256
    %1832 = vmatprep.subr.bf16.mxu0 %v1251
    %1833 = vmatpush1.bf16.msra.mxu0 %v1250
    %1834 = vmatprep.subr.bf16.mxu0 %v1245
    %1835 = vmatpush1.bf16.msra.mxu0 %v1244
    %1836 = vmatprep.subr.bf16.mxu0 %v1335
    %1837 = vmatpush2.bf16.msra.mxu0 %v1334
    %1838 = vmatprep.subr.bf16.mxu0 %v1329
    %1839 = vmatpush2.bf16.msra.mxu0 %v1328
    %1840 = vmatprep.subr.bf16.mxu0 %v1323
    %1841 = vmatpush2.bf16.msra.mxu0 %v1322
    %1842 = vmatprep.subr.bf16.mxu0 %v1317
    %1843 = vmatpush2.bf16.msra.mxu0 %v1316
    %1844 = vmatprep.subr.bf16.mxu0 %v1311
    %1845 = vmatpush2.bf16.msra.mxu0 %v1310
    %1846 = vmatprep.subr.bf16.mxu0 %v1305
    %1847 = vmatpush2.bf16.msra.mxu0 %v1304
    %1848 = vmatprep.subr.bf16.mxu0 %v1299
    %1849 = vmatpush2.bf16.msra.mxu0 %v1298
    %1850 = vmatprep.subr.bf16.mxu0 %v1293
    %1851 = vmatpush2.bf16.msra.mxu0 %v1292
    %1852 = vmatprep.mubr.bf16.mxu0 %v369
    %1853 = vmatmul.mubr.bf16.gmra.mxu0 %v368
    %v1854 = vpop.f32.mrf.mxu0
    %v1855 = vadd.f32 %v323, %v1854
    %v1856 = vpop.f32.mrf.mxu0
    %v1857 = vadd.f32 %v327, %v1856
    %v1858 = vpop.f32.mrf.mxu0
    %v1859 = vadd.f32 %v323, %v1858
    %v1860 = vpop.f32.mrf.mxu0
    %v1861 = vadd.f32 %v327, %v1860
    %1862 = vdwg.mxu0
    %1863 = vmatprep.subr.bf16.mxu0 %v1383
    %1864 = vmatpush1.bf16.msra.mxu0 %v1382
    %1865 = vmatprep.subr.bf16.mxu0 %v1377
    %1866 = vmatpush1.bf16.msra.mxu0 %v1376
    %1867 = vmatprep.subr.bf16.mxu0 %v1371
    %1868 = vmatpush1.bf16.msra.mxu0 %v1370
    %1869 = vmatprep.subr.bf16.mxu0 %v1365
    %1870 = vmatpush1.bf16.msra.mxu0 %v1364
    %1871 = vmatprep.subr.bf16.mxu0 %v1359
    %1872 = vmatpush1.bf16.msra.mxu0 %v1358
    %1873 = vmatprep.subr.bf16.mxu0 %v1353
    %1874 = vmatpush1.bf16.msra.mxu0 %v1352
    %1875 = vmatprep.subr.bf16.mxu0 %v1347
    %1876 = vmatpush1.bf16.msra.mxu0 %v1346
    %1877 = vmatprep.subr.bf16.mxu0 %v1341
    %1878 = vmatpush1.bf16.msra.mxu0 %v1340
    %1879 = vmatprep.subr.bf16.mxu0 %v1431
    %1880 = vmatpush2.bf16.msra.mxu0 %v1430
    %1881 = vmatprep.subr.bf16.mxu0 %v1425
    %1882 = vmatpush2.bf16.msra.mxu0 %v1424
    %1883 = vmatprep.subr.bf16.mxu0 %v1419
    %1884 = vmatpush2.bf16.msra.mxu0 %v1418
    %1885 = vmatprep.subr.bf16.mxu0 %v1413
    %1886 = vmatpush2.bf16.msra.mxu0 %v1412
    %1887 = vmatprep.subr.bf16.mxu0 %v1407
    %1888 = vmatpush2.bf16.msra.mxu0 %v1406
    %1889 = vmatprep.subr.bf16.mxu0 %v1401
    %1890 = vmatpush2.bf16.msra.mxu0 %v1400
    %1891 = vmatprep.subr.bf16.mxu0 %v1395
    %1892 = vmatpush2.bf16.msra.mxu0 %v1394
    %1893 = vmatprep.subr.bf16.mxu0 %v1389
    %1894 = vmatpush2.bf16.msra.mxu0 %v1388
    %1895 = vmatprep.mubr.bf16.mxu0 %v371
    %1896 = vmatmul.mubr.bf16.gmra.mxu0 %v370
    %v1897 = vpop.f32.mrf.mxu0
    %v1898 = vadd.f32 %v1855, %v1897
    %v1899 = vpop.f32.mrf.mxu0
    %v1900 = vadd.f32 %v1857, %v1899
    %v1901 = vpop.f32.mrf.mxu0
    %v1902 = vadd.f32 %v1859, %v1901
    %v1903 = vpop.f32.mrf.mxu0
    %v1904 = vadd.f32 %v1861, %v1903
    %1905 = vdwg.mxu0
    %1906 = vmatprep.subr.bf16.mxu0 %v1479
    %1907 = vmatpush1.bf16.msra.mxu0 %v1478
    %1908 = vmatprep.subr.bf16.mxu0 %v1473
    %1909 = vmatpush1.bf16.msra.mxu0 %v1472
    %1910 = vmatprep.subr.bf16.mxu0 %v1467
    %1911 = vmatpush1.bf16.msra.mxu0 %v1466
    %1912 = vmatprep.subr.bf16.mxu0 %v1461
    %1913 = vmatpush1.bf16.msra.mxu0 %v1460
    %1914 = vmatprep.subr.bf16.mxu0 %v1455
    %1915 = vmatpush1.bf16.msra.mxu0 %v1454
    %1916 = vmatprep.subr.bf16.mxu0 %v1449
    %1917 = vmatpush1.bf16.msra.mxu0 %v1448
    %1918 = vmatprep.subr.bf16.mxu0 %v1443
    %1919 = vmatpush1.bf16.msra.mxu0 %v1442
    %1920 = vmatprep.subr.bf16.mxu0 %v1437
    %1921 = vmatpush1.bf16.msra.mxu0 %v1436
    %1922 = vmatprep.subr.bf16.mxu0 %v1527
    %1923 = vmatpush2.bf16.msra.mxu0 %v1526
    %1924 = vmatprep.subr.bf16.mxu0 %v1521
    %1925 = vmatpush2.bf16.msra.mxu0 %v1520
    %1926 = vmatprep.subr.bf16.mxu0 %v1515
    %1927 = vmatpush2.bf16.msra.mxu0 %v1514
    %1928 = vmatprep.subr.bf16.mxu0 %v1509
    %1929 = vmatpush2.bf16.msra.mxu0 %v1508
    %1930 = vmatprep.subr.bf16.mxu0 %v1503
    %1931 = vmatpush2.bf16.msra.mxu0 %v1502
    %1932 = vmatprep.subr.bf16.mxu0 %v1497
    %1933 = vmatpush2.bf16.msra.mxu0 %v1496
    %1934 = vmatprep.subr.bf16.mxu0 %v1491
    %1935 = vmatpush2.bf16.msra.mxu0 %v1490
    %1936 = vmatprep.subr.bf16.mxu0 %v1485
    %1937 = vmatpush2.bf16.msra.mxu0 %v1484
    %1938 = vmatprep.mubr.bf16.mxu0 %v373
    %1939 = vmatmul.mubr.bf16.gmra.mxu0 %v372
    %v1940 = vpop.f32.mrf.mxu0
    %v1941 = vadd.f32 %v1898, %v1940
    %v1942 = vpop.f32.mrf.mxu0
    %v1943 = vadd.f32 %v1900, %v1942
    %v1944 = vpop.f32.mrf.mxu0
    %v1945 = vadd.f32 %v1902, %v1944
    %v1946 = vpop.f32.mrf.mxu0
    %v1947 = vadd.f32 %v1904, %v1946
    %1948 = vdwg.mxu0
    %1949 = vmatprep.subr.bf16.mxu0 %v1289
    %1950 = vmatpush1.bf16.msra.mxu0 %v1288
    %1951 = vmatprep.subr.bf16.mxu0 %v1283
    %1952 = vmatpush1.bf16.msra.mxu0 %v1282
    %1953 = vmatprep.subr.bf16.mxu0 %v1277
    %1954 = vmatpush1.bf16.msra.mxu0 %v1276
    %1955 = vmatprep.subr.bf16.mxu0 %v1271
    %1956 = vmatpush1.bf16.msra.mxu0 %v1270
    %1957 = vmatprep.subr.bf16.mxu0 %v1265
    %1958 = vmatpush1.bf16.msra.mxu0 %v1264
    %1959 = vmatprep.subr.bf16.mxu0 %v1259
    %1960 = vmatpush1.bf16.msra.mxu0 %v1258
    %1961 = vmatprep.subr.bf16.mxu0 %v1253
    %1962 = vmatpush1.bf16.msra.mxu0 %v1252
    %1963 = vmatprep.subr.bf16.mxu0 %v1247
    %1964 = vmatpush1.bf16.msra.mxu0 %v1246
    %1965 = vmatprep.subr.bf16.mxu0 %v1337
    %1966 = vmatpush2.bf16.msra.mxu0 %v1336
    %1967 = vmatprep.subr.bf16.mxu0 %v1331
    %1968 = vmatpush2.bf16.msra.mxu0 %v1330
    %1969 = vmatprep.subr.bf16.mxu0 %v1325
    %1970 = vmatpush2.bf16.msra.mxu0 %v1324
    %1971 = vmatprep.subr.bf16.mxu0 %v1319
    %1972 = vmatpush2.bf16.msra.mxu0 %v1318
    %1973 = vmatprep.subr.bf16.mxu0 %v1313
    %1974 = vmatpush2.bf16.msra.mxu0 %v1312
    %1975 = vmatprep.subr.bf16.mxu0 %v1307
    %1976 = vmatpush2.bf16.msra.mxu0 %v1306
    %1977 = vmatprep.subr.bf16.mxu0 %v1301
    %1978 = vmatpush2.bf16.msra.mxu0 %v1300
    %1979 = vmatprep.subr.bf16.mxu0 %v1295
    %1980 = vmatpush2.bf16.msra.mxu0 %v1294
    %1981 = vmatprep.mubr.bf16.mxu0 %v369
    %1982 = vmatmul.mubr.bf16.gmra.mxu0 %v368
    %v1983 = vpop.f32.mrf.mxu0
    %v1984 = vadd.f32 %v331, %v1983
    %v1985 = vpop.f32.mrf.mxu0
    %v1986 = vadd.f32 %v335, %v1985
    %v1987 = vpop.f32.mrf.mxu0
    %v1988 = vadd.f32 %v331, %v1987
    %v1989 = vpop.f32.mrf.mxu0
    %v1990 = vadd.f32 %v335, %v1989
    %1991 = vdwg.mxu0
    %1992 = vmatprep.subr.bf16.mxu0 %v1385
    %1993 = vmatpush1.bf16.msra.mxu0 %v1384
    %1994 = vmatprep.subr.bf16.mxu0 %v1379
    %1995 = vmatpush1.bf16.msra.mxu0 %v1378
    %1996 = vmatprep.subr.bf16.mxu0 %v1373
    %1997 = vmatpush1.bf16.msra.mxu0 %v1372
    %1998 = vmatprep.subr.bf16.mxu0 %v1367
    %1999 = vmatpush1.bf16.msra.mxu0 %v1366
    %2000 = vmatprep.subr.bf16.mxu0 %v1361
    %2001 = vmatpush1.bf16.msra.mxu0 %v1360
    %2002 = vmatprep.subr.bf16.mxu0 %v1355
    %2003 = vmatpush1.bf16.msra.mxu0 %v1354
    %2004 = vmatprep.subr.bf16.mxu0 %v1349
    %2005 = vmatpush1.bf16.msra.mxu0 %v1348
    %2006 = vmatprep.subr.bf16.mxu0 %v1343
    %2007 = vmatpush1.bf16.msra.mxu0 %v1342
    %2008 = vmatprep.subr.bf16.mxu0 %v1433
    %2009 = vmatpush2.bf16.msra.mxu0 %v1432
    %2010 = vmatprep.subr.bf16.mxu0 %v1427
    %2011 = vmatpush2.bf16.msra.mxu0 %v1426
    %2012 = vmatprep.subr.bf16.mxu0 %v1421
    %2013 = vmatpush2.bf16.msra.mxu0 %v1420
    %2014 = vmatprep.subr.bf16.mxu0 %v1415
    %2015 = vmatpush2.bf16.msra.mxu0 %v1414
    %2016 = vmatprep.subr.bf16.mxu0 %v1409
    %2017 = vmatpush2.bf16.msra.mxu0 %v1408
    %2018 = vmatprep.subr.bf16.mxu0 %v1403
    %2019 = vmatpush2.bf16.msra.mxu0 %v1402
    %2020 = vmatprep.subr.bf16.mxu0 %v1397
    %2021 = vmatpush2.bf16.msra.mxu0 %v1396
    %2022 = vmatprep.subr.bf16.mxu0 %v1391
    %2023 = vmatpush2.bf16.msra.mxu0 %v1390
    %2024 = vmatprep.mubr.bf16.mxu0 %v371
    %2025 = vmatmul.mubr.bf16.gmra.mxu0 %v370
    %v2026 = vpop.f32.mrf.mxu0
    %v2027 = vadd.f32 %v1984, %v2026
    %v2028 = vpop.f32.mrf.mxu0
    %v2029 = vadd.f32 %v1986, %v2028
    %v2030 = vpop.f32.mrf.mxu0
    %v2031 = vadd.f32 %v1988, %v2030
    %v2032 = vpop.f32.mrf.mxu0
    %v2033 = vadd.f32 %v1990, %v2032
    %2034 = vdwg.mxu0
    %2035 = vmatprep.subr.bf16.mxu0 %v1481
    %2036 = vmatpush1.bf16.msra.mxu0 %v1480
    %2037 = vmatprep.subr.bf16.mxu0 %v1475
    %2038 = vmatpush1.bf16.msra.mxu0 %v1474
    %2039 = vmatprep.subr.bf16.mxu0 %v1469
    %2040 = vmatpush1.bf16.msra.mxu0 %v1468
    %2041 = vmatprep.subr.bf16.mxu0 %v1463
    %2042 = vmatpush1.bf16.msra.mxu0 %v1462
    %2043 = vmatprep.subr.bf16.mxu0 %v1457
    %2044 = vmatpush1.bf16.msra.mxu0 %v1456
    %2045 = vmatprep.subr.bf16.mxu0 %v1451
    %2046 = vmatpush1.bf16.msra.mxu0 %v1450
    %2047 = vmatprep.subr.bf16.mxu0 %v1445
    %2048 = vmatpush1.bf16.msra.mxu0 %v1444
    %2049 = vmatprep.subr.bf16.mxu0 %v1439
    %2050 = vmatpush1.bf16.msra.mxu0 %v1438
    %2051 = vmatprep.subr.bf16.mxu0 %v1529
    %2052 = vmatpush2.bf16.msra.mxu0 %v1528
    %2053 = vmatprep.subr.bf16.mxu0 %v1523
    %2054 = vmatpush2.bf16.msra.mxu0 %v1522
    %2055 = vmatprep.subr.bf16.mxu0 %v1517
    %2056 = vmatpush2.bf16.msra.mxu0 %v1516
    %2057 = vmatprep.subr.bf16.mxu0 %v1511
    %2058 = vmatpush2.bf16.msra.mxu0 %v1510
    %2059 = vmatprep.subr.bf16.mxu0 %v1505
    %2060 = vmatpush2.bf16.msra.mxu0 %v1504
    %2061 = vmatprep.subr.bf16.mxu0 %v1499
    %2062 = vmatpush2.bf16.msra.mxu0 %v1498
    %2063 = vmatprep.subr.bf16.mxu0 %v1493
    %2064 = vmatpush2.bf16.msra.mxu0 %v1492
    %2065 = vmatprep.subr.bf16.mxu0 %v1487
    %2066 = vmatpush2.bf16.msra.mxu0 %v1486
    %2067 = vmatprep.mubr.bf16.mxu0 %v373
    %2068 = vmatmul.mubr.bf16.gmra.mxu0 %v372
    %v2069 = vpop.f32.mrf.mxu0
    %v2070 = vadd.f32 %v2027, %v2069
    %v2071 = vpop.f32.mrf.mxu0
    %v2072 = vadd.f32 %v2029, %v2071
    %v2073 = vpop.f32.mrf.mxu0
    %v2074 = vadd.f32 %v2031, %v2073
    %v2075 = vpop.f32.mrf.mxu0
    %v2076 = vadd.f32 %v2033, %v2075
    %2077 = vdwg.mxu0
    %2078 = vmatprep.subr.bf16.mxu0 %v1291
    %2079 = vmatpush1.bf16.msra.mxu0 %v1290
    %2080 = vmatprep.subr.bf16.mxu0 %v1285
    %2081 = vmatpush1.bf16.msra.mxu0 %v1284
    %2082 = vmatprep.subr.bf16.mxu0 %v1279
    %2083 = vmatpush1.bf16.msra.mxu0 %v1278
    %2084 = vmatprep.subr.bf16.mxu0 %v1273
    %2085 = vmatpush1.bf16.msra.mxu0 %v1272
    %2086 = vmatprep.subr.bf16.mxu0 %v1267
    %2087 = vmatpush1.bf16.msra.mxu0 %v1266
    %2088 = vmatprep.subr.bf16.mxu0 %v1261
    %2089 = vmatpush1.bf16.msra.mxu0 %v1260
    %2090 = vmatprep.subr.bf16.mxu0 %v1255
    %2091 = vmatpush1.bf16.msra.mxu0 %v1254
    %2092 = vmatprep.subr.bf16.mxu0 %v1249
    %2093 = vmatpush1.bf16.msra.mxu0 %v1248
    %2094 = vmatprep.subr.bf16.mxu0 %v1339
    %2095 = vmatpush2.bf16.msra.mxu0 %v1338
    %2096 = vmatprep.subr.bf16.mxu0 %v1333
    %2097 = vmatpush2.bf16.msra.mxu0 %v1332
    %2098 = vmatprep.subr.bf16.mxu0 %v1327
    %2099 = vmatpush2.bf16.msra.mxu0 %v1326
    %2100 = vmatprep.subr.bf16.mxu0 %v1321
    %2101 = vmatpush2.bf16.msra.mxu0 %v1320
    %2102 = vmatprep.subr.bf16.mxu0 %v1315
    %2103 = vmatpush2.bf16.msra.mxu0 %v1314
    %2104 = vmatprep.subr.bf16.mxu0 %v1309
    %2105 = vmatpush2.bf16.msra.mxu0 %v1308
    %2106 = vmatprep.subr.bf16.mxu0 %v1303
    %2107 = vmatpush2.bf16.msra.mxu0 %v1302
    %2108 = vmatprep.subr.bf16.mxu0 %v1297
    %2109 = vmatpush2.bf16.msra.mxu0 %v1296
    %2110 = vmatprep.mubr.bf16.mxu0 %v369
    %2111 = vmatmul.mubr.bf16.gmra.mxu0 %v368
    %v2112 = vpop.f32.mrf.mxu0
    %v2113 = vadd.f32 %v339, %v2112
    %v2114 = vpop.f32.mrf.mxu0
    %v2115 = vadd.f32 %v343, %v2114
    %v2116 = vpop.f32.mrf.mxu0
    %v2117 = vadd.f32 %v339, %v2116
    %v2118 = vpop.f32.mrf.mxu0
    %v2119 = vadd.f32 %v343, %v2118
    %2120 = vdwg.mxu0
    %2121 = vmatprep.subr.bf16.mxu0 %v1387
    %2122 = vmatpush1.bf16.msra.mxu0 %v1386
    %2123 = vmatprep.subr.bf16.mxu0 %v1381
    %2124 = vmatpush1.bf16.msra.mxu0 %v1380
    %2125 = vmatprep.subr.bf16.mxu0 %v1375
    %2126 = vmatpush1.bf16.msra.mxu0 %v1374
    %2127 = vmatprep.subr.bf16.mxu0 %v1369
    %2128 = vmatpush1.bf16.msra.mxu0 %v1368
    %2129 = vmatprep.subr.bf16.mxu0 %v1363
    %2130 = vmatpush1.bf16.msra.mxu0 %v1362
    %2131 = vmatprep.subr.bf16.mxu0 %v1357
    %2132 = vmatpush1.bf16.msra.mxu0 %v1356
    %2133 = vmatprep.subr.bf16.mxu0 %v1351
    %2134 = vmatpush1.bf16.msra.mxu0 %v1350
    %2135 = vmatprep.subr.bf16.mxu0 %v1345
    %2136 = vmatpush1.bf16.msra.mxu0 %v1344
    %2137 = vmatprep.subr.bf16.mxu0 %v1435
    %2138 = vmatpush2.bf16.msra.mxu0 %v1434
    %2139 = vmatprep.subr.bf16.mxu0 %v1429
    %2140 = vmatpush2.bf16.msra.mxu0 %v1428
    %2141 = vmatprep.subr.bf16.mxu0 %v1423
    %2142 = vmatpush2.bf16.msra.mxu0 %v1422
    %2143 = vmatprep.subr.bf16.mxu0 %v1417
    %2144 = vmatpush2.bf16.msra.mxu0 %v1416
    %2145 = vmatprep.subr.bf16.mxu0 %v1411
    %2146 = vmatpush2.bf16.msra.mxu0 %v1410
    %2147 = vmatprep.subr.bf16.mxu0 %v1405
    %2148 = vmatpush2.bf16.msra.mxu0 %v1404
    %2149 = vmatprep.subr.bf16.mxu0 %v1399
    %2150 = vmatpush2.bf16.msra.mxu0 %v1398
    %2151 = vmatprep.subr.bf16.mxu0 %v1393
    %2152 = vmatpush2.bf16.msra.mxu0 %v1392
    %2153 = vmatprep.mubr.bf16.mxu0 %v371
    %2154 = vmatmul.mubr.bf16.gmra.mxu0 %v370
    %v2155 = vpop.f32.mrf.mxu0
    %v2156 = vadd.f32 %v2113, %v2155
    %v2157 = vpop.f32.mrf.mxu0
    %v2158 = vadd.f32 %v2115, %v2157
    %v2159 = vpop.f32.mrf.mxu0
    %v2160 = vadd.f32 %v2117, %v2159
    %v2161 = vpop.f32.mrf.mxu0
    %v2162 = vadd.f32 %v2119, %v2161
    %2163 = vdwg.mxu0
    %2164 = vmatprep.subr.bf16.mxu0 %v1483
    %2165 = vmatpush1.bf16.msra.mxu0 %v1482
    %2166 = vmatprep.subr.bf16.mxu0 %v1477
    %2167 = vmatpush1.bf16.msra.mxu0 %v1476
    %2168 = vmatprep.subr.bf16.mxu0 %v1471
    %2169 = vmatpush1.bf16.msra.mxu0 %v1470
    %2170 = vmatprep.subr.bf16.mxu0 %v1465
    %2171 = vmatpush1.bf16.msra.mxu0 %v1464
    %2172 = vmatprep.subr.bf16.mxu0 %v1459
    %2173 = vmatpush1.bf16.msra.mxu0 %v1458
    %2174 = vmatprep.subr.bf16.mxu0 %v1453
    %2175 = vmatpush1.bf16.msra.mxu0 %v1452
    %2176 = vmatprep.subr.bf16.mxu0 %v1447
    %2177 = vmatpush1.bf16.msra.mxu0 %v1446
    %2178 = vmatprep.subr.bf16.mxu0 %v1441
    %2179 = vmatpush1.bf16.msra.mxu0 %v1440
    %2180 = vmatprep.subr.bf16.mxu0 %v1531
    %2181 = vmatpush2.bf16.msra.mxu0 %v1530
    %2182 = vmatprep.subr.bf16.mxu0 %v1525
    %2183 = vmatpush2.bf16.msra.mxu0 %v1524
    %2184 = vmatprep.subr.bf16.mxu0 %v1519
    %2185 = vmatpush2.bf16.msra.mxu0 %v1518
    %2186 = vmatprep.subr.bf16.mxu0 %v1513
    %2187 = vmatpush2.bf16.msra.mxu0 %v1512
    %2188 = vmatprep.subr.bf16.mxu0 %v1507
    %2189 = vmatpush2.bf16.msra.mxu0 %v1506
    %2190 = vmatprep.subr.bf16.mxu0 %v1501
    %2191 = vmatpush2.bf16.msra.mxu0 %v1500
    %2192 = vmatprep.subr.bf16.mxu0 %v1495
    %2193 = vmatpush2.bf16.msra.mxu0 %v1494
    %2194 = vmatprep.subr.bf16.mxu0 %v1489
    %2195 = vmatpush2.bf16.msra.mxu0 %v1488
    %2196 = vmatprep.mubr.bf16.mxu0 %v373
    %2197 = vmatmul.mubr.bf16.gmra.mxu0 %v372
    %v2198 = vpop.f32.mrf.mxu0
    %v2199 = vadd.f32 %v2156, %v2198
    %v2200 = vpop.f32.mrf.mxu0
    %v2201 = vadd.f32 %v2158, %v2200
    %v2202 = vpop.f32.mrf.mxu0
    %v2203 = vadd.f32 %v2160, %v2202
    %v2204 = vpop.f32.mrf.mxu0
    %v2205 = vadd.f32 %v2162, %v2204
    %2206 = vdwg.mxu0
    %v2207 = vld [vmem:[%s1] sm:$0xff]
    %v2208 = vld [vmem:[%s1 + $0x8] sm:$0xff]
    %v2209 = vld [vmem:[%s1 + $0x10] sm:$0xff]
    %v2210 = vld [vmem:[%s1 + $0x18] sm:$0xff]
    %v2211 = vld [vmem:[%s1 + $0x20] sm:$0xff]
    %v2212 = vld [vmem:[%s1 + $0x28] sm:$0xff]
    %v2213 = vld [vmem:[%s1 + $0x30] sm:$0xff]
    %v2214 = vld [vmem:[%s1 + $0x38] sm:$0xff]
    %v2215 = vld [vmem:[%s1 + $0x40] sm:$0xff]
    %v2216 = vld [vmem:[%s1 + $0x48] sm:$0xff]
    %v2217 = vld [vmem:[%s1 + $0x50] sm:$0xff]
    %v2218 = vld [vmem:[%s1 + $0x58] sm:$0xff]
    %v2219 = vadd.f32 %v1941, %v2207
    %v2220 = vadd.f32 %v1943, %v2208
    %v2221 = vadd.f32 %v2070, %v2209
    %v2222 = vadd.f32 %v2072, %v2210
    %v2223 = vadd.f32 %v2199, %v2211
    %v2224 = vadd.f32 %v2201, %v2212
    %v2225 = vadd.f32 %v1945, %v2213
    %v2226 = vadd.f32 %v1947, %v2214
    %v2227 = vadd.f32 %v2074, %v2215
    %v2228 = vadd.f32 %v2076, %v2216
    %v2229 = vadd.f32 %v2203, %v2217
    %v2230 = vadd.f32 %v2205, %v2218
    %v2231 = vadd.f32 %v2219, %v2220
    %v2232 = vadd.f32 %v2231, %v2221
    %v2233 = vadd.f32 %v2232, %v2222
    %v2234 = vadd.f32 %v2233, %v2223
    %v2235 = vadd.f32 %v2234, %v2224
    %2236 = vadd.xlane.f32.xlu0 %v2235
    %v2237 = vpop.xlane.xlu0 %2236
    %v2238 = vadd.f32 %v2225, %v2226
    %v2239 = vadd.f32 %v2238, %v2227
    %v2240 = vadd.f32 %v2239, %v2228
    %v2241 = vadd.f32 %v2240, %v2229
    %v2242 = vadd.f32 %v2241, %v2230
    %2243 = vadd.xlane.f32.xlu0 %v2242
    %v2244 = vpop.xlane.xlu0 %2243
    %v2245 = vrcp.pop 768.0
    %v2246 = vmul.f32 %v2237, %v2245
    %v2247 = vmul.f32 %v2244, %v2245
    %v2248 = vsub.f32 %v2219, %v2246
    %v2249 = vsub.f32 %v2220, %v2246
    %v2250 = vsub.f32 %v2221, %v2246
    %v2251 = vsub.f32 %v2222, %v2246
    %v2252 = vsub.f32 %v2223, %v2246
    %v2253 = vsub.f32 %v2224, %v2246
    %v2254 = vsub.f32 %v2225, %v2247
    %v2255 = vsub.f32 %v2226, %v2247
    %v2256 = vsub.f32 %v2227, %v2247
    %v2257 = vsub.f32 %v2228, %v2247
    %v2258 = vsub.f32 %v2229, %v2247
    %v2259 = vsub.f32 %v2230, %v2247
    %v2260 = vmul.f32 %v2248, %v2248
    %v2261 = vmul.f32 %v2249, %v2249
    %v2262 = vmul.f32 %v2250, %v2250
    %v2263 = vmul.f32 %v2251, %v2251
    %v2264 = vmul.f32 %v2252, %v2252
    %v2265 = vmul.f32 %v2253, %v2253
    %v2266 = vmul.f32 %v2254, %v2254
    %v2267 = vmul.f32 %v2255, %v2255
    %v2268 = vmul.f32 %v2256, %v2256
    %v2269 = vmul.f32 %v2257, %v2257
    %v2270 = vmul.f32 %v2258, %v2258
    %v2271 = vmul.f32 %v2259, %v2259
    %v2272 = vadd.f32 %v2260, %v2261
    %v2273 = vadd.f32 %v2272, %v2262
    %v2274 = vadd.f32 %v2273, %v2263
    %v2275 = vadd.f32 %v2274, %v2264
    %v2276 = vadd.f32 %v2275, %v2265
    %2277 = vadd.xlane.f32.xlu0 %v2276
    %v2278 = vpop.xlane.xlu0 %2277
    %v2279 = vadd.f32 %v2266, %v2267
    %v2280 = vadd.f32 %v2279, %v2268
    %v2281 = vadd.f32 %v2280, %v2269
    %v2282 = vadd.f32 %v2281, %v2270
    %v2283 = vadd.f32 %v2282, %v2271
    %2284 = vadd.xlane.f32.xlu0 %v2283
    %v2285 = vpop.xlane.xlu0 %2284
    %v2286 = vmul.f32 %v2278, %v2245
    %v2287 = vmul.f32 %v2285, %v2245
    %v2288 = vld [vmem:[%s4] sm:$0x3f]
    %v2289 = vadd.f32 %v2286, 1e-12
    %v2290 = vadd.f32 %v2287, 1e-12
    %v2291 = vrsqrt.pop %v2289
    %v2292 = vrsqrt.pop %v2290
    %v2293 = vmul.f32 %v2248, %v2291
    %v2294 = vmul.f32 %v2249, %v2291
    %v2295 = vmul.f32 %v2250, %v2291
    %v2296 = vmul.f32 %v2251, %v2291
    %v2297 = vmul.f32 %v2252, %v2291
    %v2298 = vmul.f32 %v2253, %v2291
    %v2299 = vmul.f32 %v2254, %v2292
    %v2300 = vmul.f32 %v2255, %v2292
    %v2301 = vmul.f32 %v2256, %v2292
    %v2302 = vmul.f32 %v2257, %v2292
    %v2303 = vmul.f32 %v2258, %v2292
    %v2304 = vmul.f32 %v2259, %v2292
    %v2306 = vlaneseq
    %v2307 = vshrl.u32 %v2306, 7
    %v2308 = vsub.s32 0, %v2307
    %v2309 = vrot.slane %v2288, %v2308
    %v2310 = vlaneseq
    %v2311 = vshrl.u32 %v2310, 7
    %v2312 = vsub.s32 1, %v2311
    %v2313 = vrot.slane %v2288, %v2312
    %v2314 = vlaneseq
    %v2315 = vshrl.u32 %v2314, 7
    %v2316 = vsub.s32 2, %v2315
    %v2317 = vrot.slane %v2288, %v2316
    %v2318 = vlaneseq
    %v2319 = vshrl.u32 %v2318, 7
    %v2320 = vsub.s32 3, %v2319
    %v2321 = vrot.slane %v2288, %v2320
    %v2322 = vlaneseq
    %v2323 = vshrl.u32 %v2322, 7
    %v2324 = vsub.s32 4, %v2323
    %v2325 = vrot.slane %v2288, %v2324
    %v2326 = vlaneseq
    %v2327 = vshrl.u32 %v2326, 7
    %v2328 = vsub.s32 5, %v2327
    %v2329 = vrot.slane %v2288, %v2328
    %v2336 = vmul.f32 %v2309, %v2293
    %v2337 = vmul.f32 %v2313, %v2294
    %v2338 = vmul.f32 %v2317, %v2295
    %v2339 = vmul.f32 %v2321, %v2296
    %v2340 = vmul.f32 %v2325, %v2297
    %v2341 = vmul.f32 %v2329, %v2298
    %v2342 = vmul.f32 %v2309, %v2299
    %v2343 = vmul.f32 %v2313, %v2300
    %v2344 = vmul.f32 %v2317, %v2301
    %v2345 = vmul.f32 %v2321, %v2302
    %v2346 = vmul.f32 %v2325, %v2303
    %v2347 = vmul.f32 %v2329, %v2304
    %v2348 = vld [vmem:[%s5] sm:$0x3f]
    %v2350 = vlaneseq
    %v2351 = vshrl.u32 %v2350, 7
    %v2352 = vsub.s32 0, %v2351
    %v2353 = vrot.slane %v2348, %v2352
    %v2354 = vlaneseq
    %v2355 = vshrl.u32 %v2354, 7
    %v2356 = vsub.s32 1, %v2355
    %v2357 = vrot.slane %v2348, %v2356
    %v2358 = vlaneseq
    %v2359 = vshrl.u32 %v2358, 7
    %v2360 = vsub.s32 2, %v2359
    %v2361 = vrot.slane %v2348, %v2360
    %v2362 = vlaneseq
    %v2363 = vshrl.u32 %v2362, 7
    %v2364 = vsub.s32 3, %v2363
    %v2365 = vrot.slane %v2348, %v2364
    %v2366 = vlaneseq
    %v2367 = vshrl.u32 %v2366, 7
    %v2368 = vsub.s32 4, %v2367
    %v2369 = vrot.slane %v2348, %v2368
    %v2370 = vlaneseq
    %v2371 = vshrl.u32 %v2370, 7
    %v2372 = vsub.s32 5, %v2371
    %v2373 = vrot.slane %v2348, %v2372
    %v2380 = vadd.f32 %v2336, %v2353
    %v2381 = vadd.f32 %v2337, %v2357
    %v2382 = vadd.f32 %v2338, %v2361
    %v2383 = vadd.f32 %v2339, %v2365
    %v2384 = vadd.f32 %v2340, %v2369
    %v2385 = vadd.f32 %v2341, %v2373
    %v2386 = vadd.f32 %v2342, %v2353
    %v2387 = vadd.f32 %v2343, %v2357
    %v2388 = vadd.f32 %v2344, %v2361
    %v2389 = vadd.f32 %v2345, %v2365
    %v2390 = vadd.f32 %v2346, %v2369
    %v2391 = vadd.f32 %v2347, %v2373
    %2392 = vst [vmem:[#allocation2] sm:$0xff] %v2380
    %2393 = vst [vmem:[#allocation2 + $0x8] sm:$0xff] %v2381
    %2394 = vst [vmem:[#allocation2 + $0x10] sm:$0xff] %v2382
    %2395 = vst [vmem:[#allocation2 + $0x18] sm:$0xff] %v2383
    %2396 = vst [vmem:[#allocation2 + $0x20] sm:$0xff] %v2384
    %2397 = vst [vmem:[#allocation2 + $0x28] sm:$0xff] %v2385
    %2398 = vst [vmem:[#allocation2 + $0x30] sm:$0xff] %v2386
    %2399 = vst [vmem:[#allocation2 + $0x38] sm:$0xff] %v2387
    %2400 = vst [vmem:[#allocation2 + $0x40] sm:$0xff] %v2388
    %2401 = vst [vmem:[#allocation2 + $0x48] sm:$0xff] %v2389
    %2402 = vst [vmem:[#allocation2 + $0x50] sm:$0xff] %v2390
    %2403 = vst [vmem:[#allocation2 + $0x58] sm:$0xff] %v2391
    // Predicated region
    $region26: #{transformer_self_output.1} parent=1 // pred_check
      _
    $region27: #{transformer_self_output.1} parent=1 // pred_check_branch
      %2405 = sbr.rel (0) target = $region29
    $region28: #{transformer_self_output.1} parent=1 // pred_region
      %s2407 = ssub.s32 1536, 1536
      %2408 = vsyncadd [#allocation3], %s2407
      %s2409 = sshll.u32 [#allocation2], 4
      %s2410 = int_to_ptr.vmem [resolvable:$true] %s2409
      %2415 = dma.vmem_to_hbm [thread:$0]  %s2410, 1536, %s6, [#allocation3], 768, 768, 48
    $region29: #{transformer_self_output.1} parent=1 // pred_fallthru
      _
    // Predicated region
    $region30: #{transformer_self_output.1} parent=1 // pred_check
      _
    $region31: #{transformer_self_output.1} parent=1 // pred_check_branch
      %2417 = sbr.rel (0) target = $region33
    $region32: #{transformer_self_output.1} parent=1 // pred_region
      %2418 = dma.done [#allocation3], 1536
    $region33: #{transformer_self_output.1} parent=1 // pred_fallthru
      _
    %2419 = vsyncpa [#allocation3], 1

</llo_original>
